<compile_context>
chip_gen: v6e
topology: v6e:2x2x1
jax: 0.10.0
libtpu: 0.0.40
codegen_flags: <defaults>
</compile_context>

<pallas_src>
import jax
import jax.numpy as jnp
from jax.experimental import pallas as pl
from jax.experimental.pallas import tpu as pltpu


# ------------------------------ fused kernel --------------------------------
def _yolov5_head_kernel(x1_ref, x2_ref, x3_ref,
                        w25_ref, b25_ref, w26_ref, b26_ref, w27_ref, b27_ref,
                        o1_ref, o2_ref, o3_ref):
    # x*_ref: (1, C_in, HW) f32     w*_ref: (C_out, C_in) f32
    # b*_ref: (C_out, 1)   f32      o*_ref: (1, C_out, HW) f32
    def conv_bn_silu(x, w, b):
        y = jnp.dot(w, x, preferred_element_type=jnp.float32)   # MXU, f32
        y = y + b                                                # folded-BN bias
        return y * jax.nn.sigmoid(y)                             # SiLU (EUP + VPU)

    o1_ref[0] = conv_bn_silu(x1_ref[0], w25_ref[...], b25_ref[...]).astype(o1_ref.dtype)
    o2_ref[0] = conv_bn_silu(x2_ref[0], w26_ref[...], b26_ref[...]).astype(o2_ref.dtype)
    o3_ref[0] = conv_bn_silu(x3_ref[0], w27_ref[...], b27_ref[...]).astype(o3_ref.dtype)


def yolov5_head_fused(x1, x2, x3, p25, p26, p27):
    """Fused head: cv25(x1), cv26(x2), cv27(x3) in a single pallas_call."""
    w25, b25 = p25
    w26, b26 = p26
    w27, b27 = p27

    N = x1.shape[0]
    C1, H1, W1 = x1.shape[1:]
    C2, H2, W2 = x2.shape[1:]
    C3, H3, W3 = x3.shape[1:]
    HW1, HW2, HW3 = H1 * W1, H2 * W2, H3 * W3
    C_out = w25.shape[0]

    # Free reshapes (row-major contiguous) -- no transpose, no HBM copy.
    x1_3d = x1.reshape(N, C1, HW1)
    x2_3d = x2.reshape(N, C2, HW2)
    x3_3d = x3.reshape(N, C3, HW3)

    o1, o2, o3 = pl.pallas_call(
        _yolov5_head_kernel,
        out_shape=(jax.ShapeDtypeStruct((N, C_out, HW1), jnp.float32),
                   jax.ShapeDtypeStruct((N, C_out, HW2), jnp.float32),
                   jax.ShapeDtypeStruct((N, C_out, HW3), jnp.float32)),
        grid=(N,),
        in_specs=[
            pl.BlockSpec((1, C1, HW1), lambda n: (n, 0, 0)),   # one image, scale 1
            pl.BlockSpec((1, C2, HW2), lambda n: (n, 0, 0)),   # one image, scale 2
            pl.BlockSpec((1, C3, HW3), lambda n: (n, 0, 0)),   # one image, scale 3
            pl.BlockSpec((C_out, C1), lambda n: (0, 0)),       # w25 (resident)
            pl.BlockSpec((C_out, 1), lambda n: (0, 0)),        # b25 (resident)
            pl.BlockSpec((C_out, C2), lambda n: (0, 0)),       # w26 (resident)
            pl.BlockSpec((C_out, 1), lambda n: (0, 0)),        # b26 (resident)
            pl.BlockSpec((C_out, C3), lambda n: (0, 0)),       # w27 (resident)
            pl.BlockSpec((C_out, 1), lambda n: (0, 0)),        # b27 (resident)
        ],
        out_specs=(
            pl.BlockSpec((1, C_out, HW1), lambda n: (n, 0, 0)),
            pl.BlockSpec((1, C_out, HW2), lambda n: (n, 0, 0)),
            pl.BlockSpec((1, C_out, HW3), lambda n: (n, 0, 0)),
        ),
        compiler_params=pltpu.CompilerParams(
            dimension_semantics=("parallel",)),                # megacore split (v7x)
    )(x1_3d, x2_3d, x3_3d, w25, b25, w26, b26, w27, b27)

    # Free reshapes back to NCHW.
    return (o1.reshape(N, C_out, H1, W1),
            o2.reshape(N, C_out, H2, W2),
            o3.reshape(N, C_out, H3, W3))


# ------------------------- parameter construction ---------------------------
def _make_conv_bn_params(key, c_in, c_out, eps=1e-5):
    """Deterministic Conv2d(1x1, bias=False) + BatchNorm2d params with BN folded
    into the conv weight/bias, all in float32 (inference semantics)."""
    k_w, k_g, k_b, k_m, k_v = jax.random.split(key, 5)
    w = jax.random.normal(k_w, (c_out, c_in), jnp.float32) * 0.02   # (C_out, C_in)
    gamma = 1.0 + 0.1 * jax.random.normal(k_g, (c_out,), jnp.float32)
    beta = 0.1 * jax.random.normal(k_b, (c_out,), jnp.float32)
    mean = 0.1 * jax.random.normal(k_m, (c_out,), jnp.float32)
    var = jnp.abs(jax.random.normal(k_v, (c_out,), jnp.float32)) + 0.5

    scale = gamma / jnp.sqrt(var + eps)            # (C_out,)
    w_fold = w * scale[:, None]                    # folded weight, f32
    b_fold = (beta - mean * scale)[:, None]        # (C_out, 1), f32
    return w_fold, b_fold


class Yolov5HeadPallas:
    """Mirrors Yolov5Head.forward (eval mode): returns [cv27(x3), cv26(x2), cv25(x1)]."""

    def __init__(self, cat_n, key):
        c_out = (5 + cat_n) * 3
        k25, k26, k27 = jax.random.split(key, 3)
        self.p25 = _make_conv_bn_params(k25, 1024, c_out)
        self.p26 = _make_conv_bn_params(k26, 512, c_out)
        self.p27 = _make_conv_bn_params(k27, 256, c_out)

    def __call__(self, x1, x2, x3):
        y1, y2, y3 = yolov5_head_fused(x1, x2, x3, self.p25, self.p26, self.p27)
        # forward(): insert(0, cv25(x1)); insert(0, cv26(x2)); insert(0, cv27(x3))
        #   -> [cv27(x3), cv26(x2), cv25(x1)]
        return [y3, y2, y1]


# --------------------------------- main --------------------------------------
if __name__ == "__main__":
    key = jax.random.PRNGKey(0)
    k_head, k1, k2, k3 = jax.random.split(key, 4)

    cat_n = 3  # -> (5 + 3) * 3 = 24 output channels per scale

    # Small spatial sizes; channel counts fixed by the module (1024/512/256).
    x1 = jax.random.normal(k1, (2, 1024, 4, 4), jnp.float32)   # deepest scale
    x2 = jax.random.normal(k2, (2, 512, 8, 8), jnp.float32)
    x3 = jax.random.normal(k3, (2, 256, 16, 16), jnp.float32)  # shallowest scale

    head = Yolov5HeadPallas(cat_n, k_head)
    fwd = jax.jit(lambda a, b, c: head(a, b, c))
    outs = fwd(x1, x2, x3)
    outs = [jax.block_until_ready(o) for o in outs]

    # Sanity check vs. plain-JAX f32 reference (relative-error check, since both
    # paths now run in f32 end to end).
    def ref(x, w, b):
        y = jnp.einsum("oc,nchw->nohw", w, x, precision=jax.lax.Precision.HIGHEST)
        y = y + b[:, 0][None, :, None, None]
        return y * jax.nn.sigmoid(y)

    refs = [ref(x3, *head.p27), ref(x2, *head.p26), ref(x1, *head.p25)]
    for o, r in zip(outs, refs):
        assert o.shape == r.shape, (o.shape, r.shape)
        rel = jnp.max(jnp.abs(o - r)) / (jnp.max(jnp.abs(r)) + 1e-6)
        assert rel < 5e-3, rel

    print("KERNEL_OK")
</pallas_src>

<mosaic_0001>
module attributes {stable_mosaic.version = 11 : i64} {
  func.func @_yolov5_head_kernel(%arg0: i32, %arg1: memref<1x1024x16xf32, #tpu.memory_space<vmem>>, %arg2: memref<1x512x64xf32, #tpu.memory_space<vmem>>, %arg3: memref<1x256x256xf32, #tpu.memory_space<vmem>>, %arg4: memref<24x1024xf32, #tpu.memory_space<vmem>>, %arg5: memref<24x1xf32, #tpu.memory_space<vmem>>, %arg6: memref<24x512xf32, #tpu.memory_space<vmem>>, %arg7: memref<24x1xf32, #tpu.memory_space<vmem>>, %arg8: memref<24x256xf32, #tpu.memory_space<vmem>>, %arg9: memref<24x1xf32, #tpu.memory_space<vmem>>, %arg10: memref<1x24x16xf32, #tpu.memory_space<vmem>>, %arg11: memref<1x24x64xf32, #tpu.memory_space<vmem>>, %arg12: memref<1x24x256xf32, #tpu.memory_space<vmem>>) attributes {dimension_semantics = [#tpu.dimension_semantics<parallel>], iteration_bounds = array<i64: 2>, scalar_prefetch = 0 : i64, scratch_operands = 0 : i64, tpu.core_type = #tpu.core_type<tc>, window_params = [{transform_indices = @transform_0, window_bounds = array<i64: 1, 1024, 16>}, {transform_indices = @transform_1, window_bounds = array<i64: 1, 512, 64>}, {transform_indices = @transform_2, window_bounds = array<i64: 1, 256, 256>}, {pipeline_mode = #tpu.pipeline_mode<synchronous>, transform_indices = @transform_3, window_bounds = array<i64: 24, 1024>}, {pipeline_mode = #tpu.pipeline_mode<synchronous>, transform_indices = @transform_4, window_bounds = array<i64: 24, 1>}, {pipeline_mode = #tpu.pipeline_mode<synchronous>, transform_indices = @transform_5, window_bounds = array<i64: 24, 512>}, {pipeline_mode = #tpu.pipeline_mode<synchronous>, transform_indices = @transform_6, window_bounds = array<i64: 24, 1>}, {pipeline_mode = #tpu.pipeline_mode<synchronous>, transform_indices = @transform_7, window_bounds = array<i64: 24, 256>}, {pipeline_mode = #tpu.pipeline_mode<synchronous>, transform_indices = @transform_8, window_bounds = array<i64: 24, 1>}, {transform_indices = @transform_9, window_bounds = array<i64: 1, 24, 16>}, {transform_indices = @transform_10, window_bounds = array<i64: 1, 24, 64>}, {transform_indices = @transform_11, window_bounds = array<i64: 1, 24, 256>}]} {
    %c0 = arith.constant 0 : index
    %c0_0 = arith.constant 0 : index
    %c0_1 = arith.constant 0 : index
    %0 = vector.load %arg1[%c0, %c0_0, %c0_1] : memref<1x1024x16xf32, #tpu.memory_space<vmem>>, vector<1x1024x16xf32>
    %1 = vector.shape_cast %0 : vector<1x1024x16xf32> to vector<1024x16xf32>
    %c0_2 = arith.constant 0 : index
    %c0_3 = arith.constant 0 : index
    %2 = vector.load %arg4[%c0_2, %c0_3] : memref<24x1024xf32, #tpu.memory_space<vmem>>, vector<24x1024xf32>
    %c0_4 = arith.constant 0 : index
    %c0_5 = arith.constant 0 : index
    %3 = vector.load %arg5[%c0_4, %c0_5] : memref<24x1xf32, #tpu.memory_space<vmem>>, vector<24x1xf32>
    %cst = arith.constant dense<0.000000e+00> : vector<24x16xf32>
    %4 = tpu.matmul %2, %1, %cst {dimension_numbers = #tpu.dot_dimension_numbers<[1], [0], [0], [1], [0, 0, 1, 1], [], []>} : vector<24x1024xf32>, vector<1024x16xf32>, vector<24x16xf32> -> vector<24x16xf32>
    %5 = vector.broadcast %3 : vector<24x1xf32> to vector<24x16xf32>
    %6 = arith.addf %4, %5 : vector<24x16xf32>
    %7 = arith.negf %6 : vector<24x16xf32>
    %8 = math.exp %7 : vector<24x16xf32>
    %cst_6 = arith.constant 1.000000e+00 : f32
    %9 = vector.broadcast %cst_6 : f32 to vector<24x16xf32>
    %10 = arith.addf %9, %8 : vector<24x16xf32>
    %11 = arith.divf %9, %10 : vector<24x16xf32>
    %12 = arith.mulf %6, %11 : vector<24x16xf32>
    %c0_7 = arith.constant 0 : index
    %c0_8 = arith.constant 0 : index
    %c0_9 = arith.constant 0 : index
    %13 = vector.load %arg10[%c0_7, %c0_8, %c0_9] : memref<1x24x16xf32, #tpu.memory_space<vmem>>, vector<1x24x16xf32>
    %14 = vector.shape_cast %13 : vector<1x24x16xf32> to vector<24x16xf32>
    %15 = vector.shape_cast %12 : vector<24x16xf32> to vector<1x24x16xf32>
    tpu.vector_store %arg10[%c0_7, %c0_8, %c0_9], %15 {strides = array<i32>} : memref<1x24x16xf32, #tpu.memory_space<vmem>>, vector<1x24x16xf32>,
    %c0_10 = arith.constant 0 : index
    %c0_11 = arith.constant 0 : index
    %c0_12 = arith.constant 0 : index
    %16 = vector.load %arg2[%c0_10, %c0_11, %c0_12] : memref<1x512x64xf32, #tpu.memory_space<vmem>>, vector<1x512x64xf32>
    %17 = vector.shape_cast %16 : vector<1x512x64xf32> to vector<512x64xf32>
    %c0_13 = arith.constant 0 : index
    %c0_14 = arith.constant 0 : index
    %18 = vector.load %arg6[%c0_13, %c0_14] : memref<24x512xf32, #tpu.memory_space<vmem>>, vector<24x512xf32>
    %c0_15 = arith.constant 0 : index
    %c0_16 = arith.constant 0 : index
    %19 = vector.load %arg7[%c0_15, %c0_16] : memref<24x1xf32, #tpu.memory_space<vmem>>, vector<24x1xf32>
    %cst_17 = arith.constant dense<0.000000e+00> : vector<24x64xf32>
    %20 = tpu.matmul %18, %17, %cst_17 {dimension_numbers = #tpu.dot_dimension_numbers<[1], [0], [0], [1], [0, 0, 1, 1], [], []>} : vector<24x512xf32>, vector<512x64xf32>, vector<24x64xf32> -> vector<24x64xf32>
    %21 = vector.broadcast %19 : vector<24x1xf32> to vector<24x64xf32>
    %22 = arith.addf %20, %21 : vector<24x64xf32>
    %23 = arith.negf %22 : vector<24x64xf32>
    %24 = math.exp %23 : vector<24x64xf32>
    %cst_18 = arith.constant 1.000000e+00 : f32
    %25 = vector.broadcast %cst_18 : f32 to vector<24x64xf32>
    %26 = arith.addf %25, %24 : vector<24x64xf32>
    %27 = arith.divf %25, %26 : vector<24x64xf32>
    %28 = arith.mulf %22, %27 : vector<24x64xf32>
    %c0_19 = arith.constant 0 : index
    %c0_20 = arith.constant 0 : index
    %c0_21 = arith.constant 0 : index
    %29 = vector.load %arg11[%c0_19, %c0_20, %c0_21] : memref<1x24x64xf32, #tpu.memory_space<vmem>>, vector<1x24x64xf32>
    %30 = vector.shape_cast %29 : vector<1x24x64xf32> to vector<24x64xf32>
    %31 = vector.shape_cast %28 : vector<24x64xf32> to vector<1x24x64xf32>
    tpu.vector_store %arg11[%c0_19, %c0_20, %c0_21], %31 {strides = array<i32>} : memref<1x24x64xf32, #tpu.memory_space<vmem>>, vector<1x24x64xf32>,
    %c0_22 = arith.constant 0 : index
    %c0_23 = arith.constant 0 : index
    %c0_24 = arith.constant 0 : index
    %32 = vector.load %arg3[%c0_22, %c0_23, %c0_24] : memref<1x256x256xf32, #tpu.memory_space<vmem>>, vector<1x256x256xf32>
    %33 = vector.shape_cast %32 : vector<1x256x256xf32> to vector<256x256xf32>
    %c0_25 = arith.constant 0 : index
    %c0_26 = arith.constant 0 : index
    %34 = vector.load %arg8[%c0_25, %c0_26] : memref<24x256xf32, #tpu.memory_space<vmem>>, vector<24x256xf32>
    %c0_27 = arith.constant 0 : index
    %c0_28 = arith.constant 0 : index
    %35 = vector.load %arg9[%c0_27, %c0_28] : memref<24x1xf32, #tpu.memory_space<vmem>>, vector<24x1xf32>
    %cst_29 = arith.constant dense<0.000000e+00> : vector<24x256xf32>
    %36 = tpu.matmul %34, %33, %cst_29 {dimension_numbers = #tpu.dot_dimension_numbers<[1], [0], [0], [1], [0, 0, 1, 1], [], []>} : vector<24x256xf32>, vector<256x256xf32>, vector<24x256xf32> -> vector<24x256xf32>
    %37 = vector.broadcast %35 : vector<24x1xf32> to vector<24x256xf32>
    %38 = arith.addf %36, %37 : vector<24x256xf32>
    %39 = arith.negf %38 : vector<24x256xf32>
    %40 = math.exp %39 : vector<24x256xf32>
    %cst_30 = arith.constant 1.000000e+00 : f32
    %41 = vector.broadcast %cst_30 : f32 to vector<24x256xf32>
    %42 = arith.addf %41, %40 : vector<24x256xf32>
    %43 = arith.divf %41, %42 : vector<24x256xf32>
    %44 = arith.mulf %38, %43 : vector<24x256xf32>
    %c0_31 = arith.constant 0 : index
    %c0_32 = arith.constant 0 : index
    %c0_33 = arith.constant 0 : index
    %45 = vector.load %arg12[%c0_31, %c0_32, %c0_33] : memref<1x24x256xf32, #tpu.memory_space<vmem>>, vector<1x24x256xf32>
    %46 = vector.shape_cast %45 : vector<1x24x256xf32> to vector<24x256xf32>
    %47 = vector.shape_cast %44 : vector<24x256xf32> to vector<1x24x256xf32>
    tpu.vector_store %arg12[%c0_31, %c0_32, %c0_33], %47 {strides = array<i32>} : memref<1x24x256xf32, #tpu.memory_space<vmem>>, vector<1x24x256xf32>,
    return
  }
  func.func @transform_0(%arg0: i32) -> (i32, i32, i32) {
    %c0_i32 = arith.constant 0 : i32
    %c0_i32_0 = arith.constant 0 : i32
    %c0_i32_1 = arith.constant 0 : i32
    return %arg0, %c0_i32, %c0_i32_0 : i32, i32, i32
  }
  func.func @transform_1(%arg0: i32) -> (i32, i32, i32) {
    %c0_i32 = arith.constant 0 : i32
    %c0_i32_0 = arith.constant 0 : i32
    %c0_i32_1 = arith.constant 0 : i32
    return %arg0, %c0_i32, %c0_i32_0 : i32, i32, i32
  }
  func.func @transform_2(%arg0: i32) -> (i32, i32, i32) {
    %c0_i32 = arith.constant 0 : i32
    %c0_i32_0 = arith.constant 0 : i32
    %c0_i32_1 = arith.constant 0 : i32
    return %arg0, %c0_i32, %c0_i32_0 : i32, i32, i32
  }
  func.func @transform_3(%arg0: i32) -> (i32, i32) {
    %c0_i32 = arith.constant 0 : i32
    %c0_i32_0 = arith.constant 0 : i32
    %c0_i32_1 = arith.constant 0 : i32
    return %c0_i32, %c0_i32_0 : i32, i32
  }
  func.func @transform_4(%arg0: i32) -> (i32, i32) {
    %c0_i32 = arith.constant 0 : i32
    %c0_i32_0 = arith.constant 0 : i32
    %c0_i32_1 = arith.constant 0 : i32
    return %c0_i32, %c0_i32_0 : i32, i32
  }
  func.func @transform_5(%arg0: i32) -> (i32, i32) {
    %c0_i32 = arith.constant 0 : i32
    %c0_i32_0 = arith.constant 0 : i32
    %c0_i32_1 = arith.constant 0 : i32
    return %c0_i32, %c0_i32_0 : i32, i32
  }
  func.func @transform_6(%arg0: i32) -> (i32, i32) {
    %c0_i32 = arith.constant 0 : i32
    %c0_i32_0 = arith.constant 0 : i32
    %c0_i32_1 = arith.constant 0 : i32
    return %c0_i32, %c0_i32_0 : i32, i32
  }
  func.func @transform_7(%arg0: i32) -> (i32, i32) {
    %c0_i32 = arith.constant 0 : i32
    %c0_i32_0 = arith.constant 0 : i32
    %c0_i32_1 = arith.constant 0 : i32
    return %c0_i32, %c0_i32_0 : i32, i32
  }
  func.func @transform_8(%arg0: i32) -> (i32, i32) {
    %c0_i32 = arith.constant 0 : i32
    %c0_i32_0 = arith.constant 0 : i32
    %c0_i32_1 = arith.constant 0 : i32
    return %c0_i32, %c0_i32_0 : i32, i32
  }
  func.func @transform_9(%arg0: i32) -> (i32, i32, i32) {
    %c0_i32 = arith.constant 0 : i32
    %c0_i32_0 = arith.constant 0 : i32
    %c0_i32_1 = arith.constant 0 : i32
    return %arg0, %c0_i32, %c0_i32_0 : i32, i32, i32
  }
  func.func @transform_10(%arg0: i32) -> (i32, i32, i32) {
    %c0_i32 = arith.constant 0 : i32
    %c0_i32_0 = arith.constant 0 : i32
    %c0_i32_1 = arith.constant 0 : i32
    return %arg0, %c0_i32, %c0_i32_0 : i32, i32, i32
  }
  func.func @transform_11(%arg0: i32) -> (i32, i32, i32) {
    %c0_i32 = arith.constant 0 : i32
    %c0_i32_0 = arith.constant 0 : i32
    %c0_i32_1 = arith.constant 0 : i32
    return %arg0, %c0_i32, %c0_i32_0 : i32, i32, i32
  }
}

</mosaic_0001>

<llo_original>
// kernel: _lambda_.1
$region0: #{_lambda_.1}
  #allocation0 [shape = 'u32[]', space=smem, size = 0x4, offset = 0x4, fixed_abs, tag = 'smem constant byte address 0x4 - core index']
  #allocation1 [shape = 'u32[144,128]{1,0:T(1,128)}', space=vmem, size = 0x12000, scoped, tag = 'internal scratch']
  %s0 = inlined_call_operand.vmem [shape: f32[2,1024,16], index: 0, kind: input, shape index: {}]
  %s1 = inlined_call_operand.vmem [shape: f32[2,512,64], index: 1, kind: input, shape index: {}]
  %s2 = inlined_call_operand.vmem [shape: f32[2,256,256], index: 2, kind: input, shape index: {}]
  %s3 = inlined_call_operand.vmem [shape: f32[24,1024], index: 3, kind: input, shape index: {}]
  %s4 = inlined_call_operand.vmem [shape: f32[24,1], index: 4, kind: input, shape index: {}]
  %s5 = inlined_call_operand.vmem [shape: f32[24,512], index: 5, kind: input, shape index: {}]
  %s6 = inlined_call_operand.vmem [shape: f32[24,1], index: 6, kind: input, shape index: {}]
  %s7 = inlined_call_operand.vmem [shape: f32[24,256], index: 7, kind: input, shape index: {}]
  %s8 = inlined_call_operand.vmem [shape: f32[24,1], index: 8, kind: input, shape index: {}]
  %s9 = inlined_call_operand.vmem [shape: f32[2,24,16], index: 9, kind: output, shape index: {0}]
  %s10 = inlined_call_operand.vmem [shape: f32[2,24,64], index: 10, kind: output, shape index: {1}]
  %s11 = inlined_call_operand.vmem [shape: f32[2,24,256], index: 11, kind: output, shape index: {2}]
  %12 = xla_tuple %s9, %s10, %s11
  %s13 = sld [smem:[#allocation0]]
  $region85: #{_lambda_.1} parent=0
    _
  %s15 = ssub.s32 1, %s13
  %s16 = scalar_select 0, %s15, %s13
  loop: start=0, step=1, limit=4
  $region2: #{_lambda_.1} parent=0 // loop_pre_header
    _
  $region3: #{_lambda_.1} parent=0 // loop_header
    %s18 = sphi 0, %s22
    %p19 = scmp.ge.s32.totalorder %s18, 4
    %s28 = sphi 0, %s30
    %s31 = sphi 0, %s28
    %s32 = sphi 0, %s31
    %s48 = sphi 0, %s32
    %s54 = sphi 0, %s56
    %s57 = sphi 0, %s54
    %s58 = sphi 0, %s57
    %s74 = sphi 0, %s58
    %s80 = sphi 0, %s82
    %s83 = sphi 0, %s80
    %s84 = sphi 0, %s83
    %s100 = sphi 0, %s84
    %s104 = sphi 0, %s104
    %s106 = sphi 0, %s104
    %s107 = sphi 0, %s106
    %s121 = sphi 0, %s107
    %s125 = sphi 0, %s125
    %s127 = sphi 0, %s125
    %s128 = sphi 0, %s127
    %s142 = sphi 0, %s128
    %s146 = sphi 0, %s146
    %s148 = sphi 0, %s146
    %s149 = sphi 0, %s148
    %s163 = sphi 0, %s149
    %s167 = sphi 0, %s167
    %s169 = sphi 0, %s167
    %s170 = sphi 0, %s169
    %s184 = sphi 0, %s170
    %s188 = sphi 0, %s188
    %s190 = sphi 0, %s188
    %s191 = sphi 0, %s190
    %s205 = sphi 0, %s191
    %s209 = sphi 0, %s209
    %s211 = sphi 0, %s209
    %s212 = sphi 0, %s211
    %s226 = sphi 0, %s212
    %s232 = sphi 0, %s234
    %s235 = sphi 0, %s232
    %s236 = sphi 0, %s235
    %s252 = sphi 0, %s236
    %s258 = sphi 0, %s260
    %s261 = sphi 0, %s258
    %s262 = sphi 0, %s261
    %s278 = sphi 0, %s262
    %s284 = sphi 0, %s286
    %s287 = sphi 0, %s284
    %s288 = sphi 0, %s287
    %s304 = sphi 0, %s288
  $region4: #{_lambda_.1} parent=0 // loop_header_branch
    %21 = sbr.rel (%p19) target = $region8
  $region5: #{_lambda_.1} parent=0 // loop_body
    %s23 = ssub.s32 %s18, 1
    %s24 = ssub.s32 %s18, 2
    %s25 = sadd.s32 %s18, 1
    %s26 = ssub.s32 %s18, %s25
    %p27 = scmp.eq.s32.totalorder %s26, 0
    %s29 = sadd.s32 %s28, 1
    %s30 = scalar_select %p27, %s28, %s29
    %p33 = pneg %p27
    %p34 = scmp.eq.s32.totalorder %s18, 1
    %p35 = por %p33, %p34
    %p36 = scmp.ne.s32.totalorder %s28, %s31
    %p37 = scmp.eq.s32.totalorder %s18, 0
    %p38 = por %p36, %p37
    %p39 = scmp.ne.s32.totalorder %s28, %s31
    %p40 = scmp.eq.s32.totalorder %s23, 1
    %p41 = por %p39, %p40
    %p42 = scmp.ne.s32.totalorder %s31, %s32
    %p43 = scmp.eq.s32.totalorder %s23, 0
    %p44 = por %p42, %p43
    %p45 = scmp.ne.s32.totalorder %s31, %s32
    %p46 = scmp.eq.s32.totalorder %s24, 1
    %p47 = por %p45, %p46
    %p49 = scmp.ne.s32.totalorder %s32, %s48
    %p50 = scmp.eq.s32.totalorder %s24, 0
    %p51 = por %p49, %p50
    %s52 = ssub.s32 %s18, %s25
    %p53 = scmp.eq.s32.totalorder %s52, 0
    %s55 = sadd.s32 %s54, 1
    %s56 = scalar_select %p53, %s54, %s55
    %p59 = pneg %p53
    %p60 = scmp.eq.s32.totalorder %s18, 1
    %p61 = por %p59, %p60
    %p62 = scmp.ne.s32.totalorder %s54, %s57
    %p63 = scmp.eq.s32.totalorder %s18, 0
    %p64 = por %p62, %p63
    %p65 = scmp.ne.s32.totalorder %s54, %s57
    %p66 = scmp.eq.s32.totalorder %s23, 1
    %p67 = por %p65, %p66
    %p68 = scmp.ne.s32.totalorder %s57, %s58
    %p69 = scmp.eq.s32.totalorder %s23, 0
    %p70 = por %p68, %p69
    %p71 = scmp.ne.s32.totalorder %s57, %s58
    %p72 = scmp.eq.s32.totalorder %s24, 1
    %p73 = por %p71, %p72
    %p75 = scmp.ne.s32.totalorder %s58, %s74
    %p76 = scmp.eq.s32.totalorder %s24, 0
    %p77 = por %p75, %p76
    %s78 = ssub.s32 %s18, %s25
    %p79 = scmp.eq.s32.totalorder %s78, 0
    %s81 = sadd.s32 %s80, 1
    %s82 = scalar_select %p79, %s80, %s81
    %p85 = pneg %p79
    %p86 = scmp.eq.s32.totalorder %s18, 1
    %p87 = por %p85, %p86
    %p88 = scmp.ne.s32.totalorder %s80, %s83
    %p89 = scmp.eq.s32.totalorder %s18, 0
    %p90 = por %p88, %p89
    %p91 = scmp.ne.s32.totalorder %s80, %s83
    %p92 = scmp.eq.s32.totalorder %s23, 1
    %p93 = por %p91, %p92
    %p94 = scmp.ne.s32.totalorder %s83, %s84
    %p95 = scmp.eq.s32.totalorder %s23, 0
    %p96 = por %p94, %p95
    %p97 = scmp.ne.s32.totalorder %s83, %s84
    %p98 = scmp.eq.s32.totalorder %s24, 1
    %p99 = por %p97, %p98
    %p101 = scmp.ne.s32.totalorder %s84, %s100
    %p102 = scmp.eq.s32.totalorder %s24, 0
    %p103 = por %p101, %p102
    %s105 = sadd.s32 %s104, 1
    %p108 = scmp.eq.s32.totalorder %s18, 1
    %p109 = scmp.ne.s32.totalorder %s104, %s106
    %p110 = scmp.eq.s32.totalorder %s18, 0
    %p111 = por %p109, %p110
    %p112 = scmp.ne.s32.totalorder %s104, %s106
    %p113 = scmp.eq.s32.totalorder %s23, 1
    %p114 = por %p112, %p113
    %p115 = scmp.ne.s32.totalorder %s106, %s107
    %p116 = scmp.eq.s32.totalorder %s23, 0
    %p117 = por %p115, %p116
    %p118 = scmp.ne.s32.totalorder %s106, %s107
    %p119 = scmp.eq.s32.totalorder %s24, 1
    %p120 = por %p118, %p119
    %p122 = scmp.ne.s32.totalorder %s107, %s121
    %p123 = scmp.eq.s32.totalorder %s24, 0
    %p124 = por %p122, %p123
    %s126 = sadd.s32 %s125, 1
    %p129 = scmp.eq.s32.totalorder %s18, 1
    %p130 = scmp.ne.s32.totalorder %s125, %s127
    %p131 = scmp.eq.s32.totalorder %s18, 0
    %p132 = por %p130, %p131
    %p133 = scmp.ne.s32.totalorder %s125, %s127
    %p134 = scmp.eq.s32.totalorder %s23, 1
    %p135 = por %p133, %p134
    %p136 = scmp.ne.s32.totalorder %s127, %s128
    %p137 = scmp.eq.s32.totalorder %s23, 0
    %p138 = por %p136, %p137
    %p139 = scmp.ne.s32.totalorder %s127, %s128
    %p140 = scmp.eq.s32.totalorder %s24, 1
    %p141 = por %p139, %p140
    %p143 = scmp.ne.s32.totalorder %s128, %s142
    %p144 = scmp.eq.s32.totalorder %s24, 0
    %p145 = por %p143, %p144
    %s147 = sadd.s32 %s146, 1
    %p150 = scmp.eq.s32.totalorder %s18, 1
    %p151 = scmp.ne.s32.totalorder %s146, %s148
    %p152 = scmp.eq.s32.totalorder %s18, 0
    %p153 = por %p151, %p152
    %p154 = scmp.ne.s32.totalorder %s146, %s148
    %p155 = scmp.eq.s32.totalorder %s23, 1
    %p156 = por %p154, %p155
    %p157 = scmp.ne.s32.totalorder %s148, %s149
    %p158 = scmp.eq.s32.totalorder %s23, 0
    %p159 = por %p157, %p158
    %p160 = scmp.ne.s32.totalorder %s148, %s149
    %p161 = scmp.eq.s32.totalorder %s24, 1
    %p162 = por %p160, %p161
    %p164 = scmp.ne.s32.totalorder %s149, %s163
    %p165 = scmp.eq.s32.totalorder %s24, 0
    %p166 = por %p164, %p165
    %s168 = sadd.s32 %s167, 1
    %p171 = scmp.eq.s32.totalorder %s18, 1
    %p172 = scmp.ne.s32.totalorder %s167, %s169
    %p173 = scmp.eq.s32.totalorder %s18, 0
    %p174 = por %p172, %p173
    %p175 = scmp.ne.s32.totalorder %s167, %s169
    %p176 = scmp.eq.s32.totalorder %s23, 1
    %p177 = por %p175, %p176
    %p178 = scmp.ne.s32.totalorder %s169, %s170
    %p179 = scmp.eq.s32.totalorder %s23, 0
    %p180 = por %p178, %p179
    %p181 = scmp.ne.s32.totalorder %s169, %s170
    %p182 = scmp.eq.s32.totalorder %s24, 1
    %p183 = por %p181, %p182
    %p185 = scmp.ne.s32.totalorder %s170, %s184
    %p186 = scmp.eq.s32.totalorder %s24, 0
    %p187 = por %p185, %p186
    %s189 = sadd.s32 %s188, 1
    %p192 = scmp.eq.s32.totalorder %s18, 1
    %p193 = scmp.ne.s32.totalorder %s188, %s190
    %p194 = scmp.eq.s32.totalorder %s18, 0
    %p195 = por %p193, %p194
    %p196 = scmp.ne.s32.totalorder %s188, %s190
    %p197 = scmp.eq.s32.totalorder %s23, 1
    %p198 = por %p196, %p197
    %p199 = scmp.ne.s32.totalorder %s190, %s191
    %p200 = scmp.eq.s32.totalorder %s23, 0
    %p201 = por %p199, %p200
    %p202 = scmp.ne.s32.totalorder %s190, %s191
    %p203 = scmp.eq.s32.totalorder %s24, 1
    %p204 = por %p202, %p203
    %p206 = scmp.ne.s32.totalorder %s191, %s205
    %p207 = scmp.eq.s32.totalorder %s24, 0
    %p208 = por %p206, %p207
    %s210 = sadd.s32 %s209, 1
    %p213 = scmp.eq.s32.totalorder %s18, 1
    %p214 = scmp.ne.s32.totalorder %s209, %s211
    %p215 = scmp.eq.s32.totalorder %s18, 0
    %p216 = por %p214, %p215
    %p217 = scmp.ne.s32.totalorder %s209, %s211
    %p218 = scmp.eq.s32.totalorder %s23, 1
    %p219 = por %p217, %p218
    %p220 = scmp.ne.s32.totalorder %s211, %s212
    %p221 = scmp.eq.s32.totalorder %s23, 0
    %p222 = por %p220, %p221
    %p223 = scmp.ne.s32.totalorder %s211, %s212
    %p224 = scmp.eq.s32.totalorder %s24, 1
    %p225 = por %p223, %p224
    %p227 = scmp.ne.s32.totalorder %s212, %s226
    %p228 = scmp.eq.s32.totalorder %s24, 0
    %p229 = por %p227, %p228
    %s230 = ssub.s32 %s18, %s25
    %p231 = scmp.eq.s32.totalorder %s230, 0
    %s233 = sadd.s32 %s232, 1
    %s234 = scalar_select %p231, %s232, %s233
    %p237 = pneg %p231
    %p238 = scmp.eq.s32.totalorder %s18, 1
    %p239 = por %p237, %p238
    %p240 = scmp.ne.s32.totalorder %s232, %s235
    %p241 = scmp.eq.s32.totalorder %s18, 0
    %p242 = por %p240, %p241
    %p243 = scmp.ne.s32.totalorder %s232, %s235
    %p244 = scmp.eq.s32.totalorder %s23, 1
    %p245 = por %p243, %p244
    %p246 = scmp.ne.s32.totalorder %s235, %s236
    %p247 = scmp.eq.s32.totalorder %s23, 0
    %p248 = por %p246, %p247
    %p249 = scmp.ne.s32.totalorder %s235, %s236
    %p250 = scmp.eq.s32.totalorder %s24, 1
    %p251 = por %p249, %p250
    %p253 = scmp.ne.s32.totalorder %s236, %s252
    %p254 = scmp.eq.s32.totalorder %s24, 0
    %p255 = por %p253, %p254
    %s256 = ssub.s32 %s18, %s25
    %p257 = scmp.eq.s32.totalorder %s256, 0
    %s259 = sadd.s32 %s258, 1
    %s260 = scalar_select %p257, %s258, %s259
    %p263 = pneg %p257
    %p264 = scmp.eq.s32.totalorder %s18, 1
    %p265 = por %p263, %p264
    %p266 = scmp.ne.s32.totalorder %s258, %s261
    %p267 = scmp.eq.s32.totalorder %s18, 0
    %p268 = por %p266, %p267
    %p269 = scmp.ne.s32.totalorder %s258, %s261
    %p270 = scmp.eq.s32.totalorder %s23, 1
    %p271 = por %p269, %p270
    %p272 = scmp.ne.s32.totalorder %s261, %s262
    %p273 = scmp.eq.s32.totalorder %s23, 0
    %p274 = por %p272, %p273
    %p275 = scmp.ne.s32.totalorder %s261, %s262
    %p276 = scmp.eq.s32.totalorder %s24, 1
    %p277 = por %p275, %p276
    %p279 = scmp.ne.s32.totalorder %s262, %s278
    %p280 = scmp.eq.s32.totalorder %s24, 0
    %p281 = por %p279, %p280
    %s282 = ssub.s32 %s18, %s25
    %p283 = scmp.eq.s32.totalorder %s282, 0
    %s285 = sadd.s32 %s284, 1
    %s286 = scalar_select %p283, %s284, %s285
    %p289 = pneg %p283
    %p290 = scmp.eq.s32.totalorder %s18, 1
    %p291 = por %p289, %p290
    %p292 = scmp.ne.s32.totalorder %s284, %s287
    %p293 = scmp.eq.s32.totalorder %s18, 0
    %p294 = por %p292, %p293
    %p295 = scmp.ne.s32.totalorder %s284, %s287
    %p296 = scmp.eq.s32.totalorder %s23, 1
    %p297 = por %p295, %p296
    %p298 = scmp.ne.s32.totalorder %s287, %s288
    %p299 = scmp.eq.s32.totalorder %s23, 0
    %p300 = por %p298, %p299
    %p301 = scmp.ne.s32.totalorder %s287, %s288
    %p302 = scmp.eq.s32.totalorder %s24, 1
    %p303 = por %p301, %p302
    %p305 = scmp.ne.s32.totalorder %s288, %s304
    %p306 = scmp.eq.s32.totalorder %s24, 0
    %p307 = por %p305, %p306
    %p308 = scmp.le.s32.totalorder 1, %s18
    %p309 = scmp.lt.s32.totalorder %s18, 3
    %p310 = pnand %p308, %p309
    %p311 = pneg %p310
    // Predicated region
    $region9: #{_lambda_.1} parent=5 // pred_check
      _
    $region10: #{_lambda_.1} parent=5 // pred_check_branch
      %313 = sbr.rel (%p310) target = $region12
    $region11: #{_lambda_.1} parent=5 // pred_region
      %s314 = ssub.s32 %s18, 1
      // Predicated region
      $region13: #{_lambda_.1} parent=11 // pred_check
        %p315 = pneg %p117
      $region14: #{_lambda_.1} parent=11 // pred_check_branch
        %317 = sbr.rel (%p315) target = $region16
      $region15: #{_lambda_.1} parent=11 // pred_region
        _
      $region16: #{_lambda_.1} parent=11 // pred_fallthru
        _
      // Predicated region
      $region17: #{_lambda_.1} parent=11 // pred_check
        %p318 = pneg %p138
      $region18: #{_lambda_.1} parent=11 // pred_check_branch
        %320 = sbr.rel (%p318) target = $region20
      $region19: #{_lambda_.1} parent=11 // pred_region
        _
      $region20: #{_lambda_.1} parent=11 // pred_fallthru
        _
      // Predicated region
      $region21: #{_lambda_.1} parent=11 // pred_check
        %p321 = pneg %p159
      $region22: #{_lambda_.1} parent=11 // pred_check_branch
        %323 = sbr.rel (%p321) target = $region24
      $region23: #{_lambda_.1} parent=11 // pred_region
        _
      $region24: #{_lambda_.1} parent=11 // pred_fallthru
        _
      // Predicated region
      $region25: #{_lambda_.1} parent=11 // pred_check
        %p324 = pneg %p180
      $region26: #{_lambda_.1} parent=11 // pred_check_branch
        %326 = sbr.rel (%p324) target = $region28
      $region27: #{_lambda_.1} parent=11 // pred_region
        _
      $region28: #{_lambda_.1} parent=11 // pred_fallthru
        _
      // Predicated region
      $region29: #{_lambda_.1} parent=11 // pred_check
        %p327 = pneg %p201
      $region30: #{_lambda_.1} parent=11 // pred_check_branch
        %329 = sbr.rel (%p327) target = $region32
      $region31: #{_lambda_.1} parent=11 // pred_region
        _
      $region32: #{_lambda_.1} parent=11 // pred_fallthru
        _
      // Predicated region
      $region33: #{_lambda_.1} parent=11 // pred_check
        %p330 = pneg %p222
      $region34: #{_lambda_.1} parent=11 // pred_check_branch
        %332 = sbr.rel (%p330) target = $region36
      $region35: #{_lambda_.1} parent=11 // pred_region
        _
      $region36: #{_lambda_.1} parent=11 // pred_fallthru
        _
    $region12: #{_lambda_.1} parent=5 // pred_fallthru
      _
    %p333 = scmp.lt.s32.totalorder %s18, 2
    // Predicated region
    $region37: #{_lambda_.1} parent=5 // pred_check
      %p334 = pneg %p333
    $region38: #{_lambda_.1} parent=5 // pred_check_branch
      %336 = sbr.rel (%p334) target = $region40
    $region39: #{_lambda_.1} parent=5 // pred_region
      // Predicated region
      $region41: #{_lambda_.1} parent=39 // pred_check
        %p337 = pneg %p38
      $region42: #{_lambda_.1} parent=39 // pred_check_branch
        %339 = sbr.rel (%p337) target = $region44
      $region43: #{_lambda_.1} parent=39 // pred_region
        %p340 = scmp.lt.s32.totalorder %s18, 1
        %s341 = scalar_select %p340, %s18, 1
        %s342 = smul.addr %s341, 128
        %s343 = smul.addr %s342, 8
        %s344 = scalar_lea.vmem %s0, %s343
      $region44: #{_lambda_.1} parent=39 // pred_fallthru
        _
      // Predicated region
      $region45: #{_lambda_.1} parent=39 // pred_check
        %p345 = pneg %p64
      $region46: #{_lambda_.1} parent=39 // pred_check_branch
        %347 = sbr.rel (%p345) target = $region48
      $region47: #{_lambda_.1} parent=39 // pred_region
        %p348 = scmp.lt.s32.totalorder %s18, 1
        %s349 = scalar_select %p348, %s18, 1
        %s350 = smul.addr %s349, 64
        %s351 = smul.addr %s350, 8
        %s352 = scalar_lea.vmem %s1, %s351
      $region48: #{_lambda_.1} parent=39 // pred_fallthru
        _
      // Predicated region
      $region49: #{_lambda_.1} parent=39 // pred_check
        %p353 = pneg %p90
      $region50: #{_lambda_.1} parent=39 // pred_check_branch
        %355 = sbr.rel (%p353) target = $region52
      $region51: #{_lambda_.1} parent=39 // pred_region
        %p356 = scmp.lt.s32.totalorder %s18, 1
        %s357 = scalar_select %p356, %s18, 1
        %s358 = smul.addr %s357, 64
        %s359 = smul.addr %s358, 8
        %s360 = scalar_lea.vmem %s2, %s359
      $region52: #{_lambda_.1} parent=39 // pred_fallthru
        _
    $region40: #{_lambda_.1} parent=5 // pred_fallthru
      _
    %p361 = scmp.le.s32.totalorder 1, %s18
    %p362 = scmp.lt.s32.totalorder %s18, 3
    %p363 = pnand %p361, %p362
    %p364 = pneg %p363
    // Predicated region
    $region53: #{_lambda_.1} parent=5 // pred_check
      _
    $region54: #{_lambda_.1} parent=5 // pred_check_branch
      %366 = sbr.rel (%p363) target = $region56
    $region55: #{_lambda_.1} parent=5 // pred_region
      %s367 = ssub.s32 %s18, 1
      %p368 = scmp.lt.s32.totalorder %s23, 1
      %s369 = scalar_select %p368, %s23, 1
      %s370 = smul.addr %s369, 128
      %s371 = smul.addr %s370, 8
      %s372 = scalar_lea.vmem %s0, %s371
      %p373 = pneg %p44
      %p374 = pneg %p41
      %p375 = scmp.lt.s32.totalorder %s23, 1
      %s376 = scalar_select %p375, %s23, 1
      %s377 = smul.addr %s376, 64
      %s378 = smul.addr %s377, 8
      %s379 = scalar_lea.vmem %s1, %s378
      %p380 = pneg %p70
      %p381 = pneg %p67
      %p382 = scmp.lt.s32.totalorder %s23, 1
      %s383 = scalar_select %p382, %s23, 1
      %s384 = smul.addr %s383, 64
      %s385 = smul.addr %s384, 8
      %s386 = scalar_lea.vmem %s2, %s385
      %p387 = pneg %p96
      %p388 = pneg %p93
      %p389 = pneg %p117
      %p390 = pneg %p114
      %p391 = pneg %p138
      %p392 = pneg %p135
      %p393 = pneg %p159
      %p394 = pneg %p156
      %p395 = pneg %p180
      %p396 = pneg %p177
      %p397 = pneg %p201
      %p398 = pneg %p198
      %p399 = pneg %p222
      %p400 = pneg %p219
      %p401 = pneg %p248
      %p402 = pneg %p245
      %p403 = scmp.lt.s32.totalorder %s23, 1
      %s404 = scalar_select %p403, %s23, 1
      %s405 = smul.addr %s404, 3
      %s406 = smul.addr %s405, 8
      %s407 = scalar_lea.vmem %s9, %s406
      %p408 = pneg %p274
      %p409 = pneg %p271
      %p410 = scmp.lt.s32.totalorder %s23, 1
      %s411 = scalar_select %p410, %s23, 1
      %s412 = smul.addr %s411, 3
      %s413 = smul.addr %s412, 8
      %s414 = scalar_lea.vmem %s10, %s413
      %p415 = pneg %p300
      %p416 = pneg %p297
      %p417 = scmp.lt.s32.totalorder %s23, 1
      %s418 = scalar_select %p417, %s23, 1
      %s419 = smul.addr %s418, 6
      %s420 = smul.addr %s419, 8
      %s421 = scalar_lea.vmem %s11, %s420
      %p422 = scmp.lt.s32.totalorder %s23, 1
      %s423 = scalar_select %p422, %s23, 1
      %s424 = smul.addr %s423, 128
      %s425 = smul.addr %s424, 8
      %s426 = scalar_lea.vmem %s0, %s425
      %p427 = scmp.lt.s32.totalorder %s23, 1
      %s428 = scalar_select %p427, %s23, 1
      %s429 = smul.addr %s428, 64
      %s430 = smul.addr %s429, 8
      %s431 = scalar_lea.vmem %s1, %s430
      %p432 = scmp.lt.s32.totalorder %s23, 1
      %s433 = scalar_select %p432, %s23, 1
      %s434 = smul.addr %s433, 64
      %s435 = smul.addr %s434, 8
      %s436 = scalar_lea.vmem %s2, %s435
      %p437 = scmp.lt.s32.totalorder %s23, 1
      %s438 = scalar_select %p437, %s23, 1
      %s439 = smul.addr %s438, 3
      %s440 = smul.addr %s439, 8
      %s441 = scalar_lea.vmem %s9, %s440
      %p442 = scmp.lt.s32.totalorder %s23, 1
      %s443 = scalar_select %p442, %s23, 1
      %s444 = smul.addr %s443, 3
      %s445 = smul.addr %s444, 8
      %s446 = scalar_lea.vmem %s10, %s445
      %p447 = scmp.lt.s32.totalorder %s23, 1
      %s448 = scalar_select %p447, %s23, 1
      %s449 = smul.addr %s448, 6
      %s450 = smul.addr %s449, 8
      %s451 = scalar_lea.vmem %s11, %s450
      %v452 = vld [vmem:[%s426] sm:$0xff]
      %v453 = vld [vmem:[%s426 + $0x8] sm:$0xff]
      %v454 = vld [vmem:[%s426 + $0x10] sm:$0xff]
      %v455 = vld [vmem:[%s426 + $0x18] sm:$0xff]
      %v456 = vld [vmem:[%s426 + $0x20] sm:$0xff]
      %v457 = vld [vmem:[%s426 + $0x28] sm:$0xff]
      %v458 = vld [vmem:[%s426 + $0x30] sm:$0xff]
      %v459 = vld [vmem:[%s426 + $0x38] sm:$0xff]
      %v460 = vld [vmem:[%s426 + $0x40] sm:$0xff]
      %v461 = vld [vmem:[%s426 + $0x48] sm:$0xff]
      %v462 = vld [vmem:[%s426 + $0x50] sm:$0xff]
      %v463 = vld [vmem:[%s426 + $0x58] sm:$0xff]
      %v464 = vld [vmem:[%s426 + $0x60] sm:$0xff]
      %v465 = vld [vmem:[%s426 + $0x68] sm:$0xff]
      %v466 = vld [vmem:[%s426 + $0x70] sm:$0xff]
      %v467 = vld [vmem:[%s426 + $0x78] sm:$0xff]
      %v468 = vld [vmem:[%s426 + $0x80] sm:$0xff]
      %v469 = vld [vmem:[%s426 + $0x88] sm:$0xff]
      %v470 = vld [vmem:[%s426 + $0x90] sm:$0xff]
      %v471 = vld [vmem:[%s426 + $0x98] sm:$0xff]
      %v472 = vld [vmem:[%s426 + $0xa0] sm:$0xff]
      %v473 = vld [vmem:[%s426 + $0xa8] sm:$0xff]
      %v474 = vld [vmem:[%s426 + $0xb0] sm:$0xff]
      %v475 = vld [vmem:[%s426 + $0xb8] sm:$0xff]
      %v476 = vld [vmem:[%s426 + $0xc0] sm:$0xff]
      %v477 = vld [vmem:[%s426 + $0xc8] sm:$0xff]
      %v478 = vld [vmem:[%s426 + $0xd0] sm:$0xff]
      %v479 = vld [vmem:[%s426 + $0xd8] sm:$0xff]
      %v480 = vld [vmem:[%s426 + $0xe0] sm:$0xff]
      %v481 = vld [vmem:[%s426 + $0xe8] sm:$0xff]
      %v482 = vld [vmem:[%s426 + $0xf0] sm:$0xff]
      %v483 = vld [vmem:[%s426 + $0xf8] sm:$0xff]
      %v484 = vld [vmem:[%s426 + $0x100] sm:$0xff]
      %v485 = vld [vmem:[%s426 + $0x108] sm:$0xff]
      %v486 = vld [vmem:[%s426 + $0x110] sm:$0xff]
      %v487 = vld [vmem:[%s426 + $0x118] sm:$0xff]
      %v488 = vld [vmem:[%s426 + $0x120] sm:$0xff]
      %v489 = vld [vmem:[%s426 + $0x128] sm:$0xff]
      %v490 = vld [vmem:[%s426 + $0x130] sm:$0xff]
      %v491 = vld [vmem:[%s426 + $0x138] sm:$0xff]
      %v492 = vld [vmem:[%s426 + $0x140] sm:$0xff]
      %v493 = vld [vmem:[%s426 + $0x148] sm:$0xff]
      %v494 = vld [vmem:[%s426 + $0x150] sm:$0xff]
      %v495 = vld [vmem:[%s426 + $0x158] sm:$0xff]
      %v496 = vld [vmem:[%s426 + $0x160] sm:$0xff]
      %v497 = vld [vmem:[%s426 + $0x168] sm:$0xff]
      %v498 = vld [vmem:[%s426 + $0x170] sm:$0xff]
      %v499 = vld [vmem:[%s426 + $0x178] sm:$0xff]
      %v500 = vld [vmem:[%s426 + $0x180] sm:$0xff]
      %v501 = vld [vmem:[%s426 + $0x188] sm:$0xff]
      %v502 = vld [vmem:[%s426 + $0x190] sm:$0xff]
      %v503 = vld [vmem:[%s426 + $0x198] sm:$0xff]
      %v504 = vld [vmem:[%s426 + $0x1a0] sm:$0xff]
      %v505 = vld [vmem:[%s426 + $0x1a8] sm:$0xff]
      %v506 = vld [vmem:[%s426 + $0x1b0] sm:$0xff]
      %v507 = vld [vmem:[%s426 + $0x1b8] sm:$0xff]
      %v508 = vld [vmem:[%s426 + $0x1c0] sm:$0xff]
      %v509 = vld [vmem:[%s426 + $0x1c8] sm:$0xff]
      %v510 = vld [vmem:[%s426 + $0x1d0] sm:$0xff]
      %v511 = vld [vmem:[%s426 + $0x1d8] sm:$0xff]
      %v512 = vld [vmem:[%s426 + $0x1e0] sm:$0xff]
      %v513 = vld [vmem:[%s426 + $0x1e8] sm:$0xff]
      %v514 = vld [vmem:[%s426 + $0x1f0] sm:$0xff]
      %v515 = vld [vmem:[%s426 + $0x1f8] sm:$0xff]
      %v516 = vld [vmem:[%s426 + $0x200] sm:$0xff]
      %v517 = vld [vmem:[%s426 + $0x208] sm:$0xff]
      %v518 = vld [vmem:[%s426 + $0x210] sm:$0xff]
      %v519 = vld [vmem:[%s426 + $0x218] sm:$0xff]
      %v520 = vld [vmem:[%s426 + $0x220] sm:$0xff]
      %v521 = vld [vmem:[%s426 + $0x228] sm:$0xff]
      %v522 = vld [vmem:[%s426 + $0x230] sm:$0xff]
      %v523 = vld [vmem:[%s426 + $0x238] sm:$0xff]
      %v524 = vld [vmem:[%s426 + $0x240] sm:$0xff]
      %v525 = vld [vmem:[%s426 + $0x248] sm:$0xff]
      %v526 = vld [vmem:[%s426 + $0x250] sm:$0xff]
      %v527 = vld [vmem:[%s426 + $0x258] sm:$0xff]
      %v528 = vld [vmem:[%s426 + $0x260] sm:$0xff]
      %v529 = vld [vmem:[%s426 + $0x268] sm:$0xff]
      %v530 = vld [vmem:[%s426 + $0x270] sm:$0xff]
      %v531 = vld [vmem:[%s426 + $0x278] sm:$0xff]
      %v532 = vld [vmem:[%s426 + $0x280] sm:$0xff]
      %v533 = vld [vmem:[%s426 + $0x288] sm:$0xff]
      %v534 = vld [vmem:[%s426 + $0x290] sm:$0xff]
      %v535 = vld [vmem:[%s426 + $0x298] sm:$0xff]
      %v536 = vld [vmem:[%s426 + $0x2a0] sm:$0xff]
      %v537 = vld [vmem:[%s426 + $0x2a8] sm:$0xff]
      %v538 = vld [vmem:[%s426 + $0x2b0] sm:$0xff]
      %v539 = vld [vmem:[%s426 + $0x2b8] sm:$0xff]
      %v540 = vld [vmem:[%s426 + $0x2c0] sm:$0xff]
      %v541 = vld [vmem:[%s426 + $0x2c8] sm:$0xff]
      %v542 = vld [vmem:[%s426 + $0x2d0] sm:$0xff]
      %v543 = vld [vmem:[%s426 + $0x2d8] sm:$0xff]
      %v544 = vld [vmem:[%s426 + $0x2e0] sm:$0xff]
      %v545 = vld [vmem:[%s426 + $0x2e8] sm:$0xff]
      %v546 = vld [vmem:[%s426 + $0x2f0] sm:$0xff]
      %v547 = vld [vmem:[%s426 + $0x2f8] sm:$0xff]
      %v548 = vld [vmem:[%s426 + $0x300] sm:$0xff]
      %v549 = vld [vmem:[%s426 + $0x308] sm:$0xff]
      %v550 = vld [vmem:[%s426 + $0x310] sm:$0xff]
      %v551 = vld [vmem:[%s426 + $0x318] sm:$0xff]
      %v552 = vld [vmem:[%s426 + $0x320] sm:$0xff]
      %v553 = vld [vmem:[%s426 + $0x328] sm:$0xff]
      %v554 = vld [vmem:[%s426 + $0x330] sm:$0xff]
      %v555 = vld [vmem:[%s426 + $0x338] sm:$0xff]
      %v556 = vld [vmem:[%s426 + $0x340] sm:$0xff]
      %v557 = vld [vmem:[%s426 + $0x348] sm:$0xff]
      %v558 = vld [vmem:[%s426 + $0x350] sm:$0xff]
      %v559 = vld [vmem:[%s426 + $0x358] sm:$0xff]
      %v560 = vld [vmem:[%s426 + $0x360] sm:$0xff]
      %v561 = vld [vmem:[%s426 + $0x368] sm:$0xff]
      %v562 = vld [vmem:[%s426 + $0x370] sm:$0xff]
      %v563 = vld [vmem:[%s426 + $0x378] sm:$0xff]
      %v564 = vld [vmem:[%s426 + $0x380] sm:$0xff]
      %v565 = vld [vmem:[%s426 + $0x388] sm:$0xff]
      %v566 = vld [vmem:[%s426 + $0x390] sm:$0xff]
      %v567 = vld [vmem:[%s426 + $0x398] sm:$0xff]
      %v568 = vld [vmem:[%s426 + $0x3a0] sm:$0xff]
      %v569 = vld [vmem:[%s426 + $0x3a8] sm:$0xff]
      %v570 = vld [vmem:[%s426 + $0x3b0] sm:$0xff]
      %v571 = vld [vmem:[%s426 + $0x3b8] sm:$0xff]
      %v572 = vld [vmem:[%s426 + $0x3c0] sm:$0xff]
      %v573 = vld [vmem:[%s426 + $0x3c8] sm:$0xff]
      %v574 = vld [vmem:[%s426 + $0x3d0] sm:$0xff]
      %v575 = vld [vmem:[%s426 + $0x3d8] sm:$0xff]
      %v576 = vld [vmem:[%s426 + $0x3e0] sm:$0xff]
      %v577 = vld [vmem:[%s426 + $0x3e8] sm:$0xff]
      %v578 = vld [vmem:[%s426 + $0x3f0] sm:$0xff]
      %v579 = vld [vmem:[%s426 + $0x3f8] sm:$0xff]
      %v580 = vld [vmem:[%s3] sm:$0xff]
      %v581 = vld [vmem:[%s3 + $0x8] sm:$0xff]
      %v582 = vld [vmem:[%s3 + $0x10] sm:$0xff]
      %v583 = vld [vmem:[%s3 + $0x18] sm:$0xff]
      %v584 = vld [vmem:[%s3 + $0x20] sm:$0xff]
      %v585 = vld [vmem:[%s3 + $0x28] sm:$0xff]
      %v586 = vld [vmem:[%s3 + $0x30] sm:$0xff]
      %v587 = vld [vmem:[%s3 + $0x38] sm:$0xff]
      %v588 = vld [vmem:[%s3 + $0x40] sm:$0xff]
      %v589 = vld [vmem:[%s3 + $0x48] sm:$0xff]
      %v590 = vld [vmem:[%s3 + $0x50] sm:$0xff]
      %v591 = vld [vmem:[%s3 + $0x58] sm:$0xff]
      %v592 = vld [vmem:[%s3 + $0x60] sm:$0xff]
      %v593 = vld [vmem:[%s3 + $0x68] sm:$0xff]
      %v594 = vld [vmem:[%s3 + $0x70] sm:$0xff]
      %v595 = vld [vmem:[%s3 + $0x78] sm:$0xff]
      %v596 = vld [vmem:[%s3 + $0x80] sm:$0xff]
      %v597 = vld [vmem:[%s3 + $0x88] sm:$0xff]
      %v598 = vld [vmem:[%s3 + $0x90] sm:$0xff]
      %v599 = vld [vmem:[%s3 + $0x98] sm:$0xff]
      %v600 = vld [vmem:[%s3 + $0xa0] sm:$0xff]
      %v601 = vld [vmem:[%s3 + $0xa8] sm:$0xff]
      %v602 = vld [vmem:[%s3 + $0xb0] sm:$0xff]
      %v603 = vld [vmem:[%s3 + $0xb8] sm:$0xff]
      %v604 = vld [vmem:[%s4] sm:$0xff]
      %v605 = vld [vmem:[%s4 + $0x8] sm:$0xff]
      %v606 = vld [vmem:[%s4 + $0x10] sm:$0xff]
      %608 = vset.pattern.permute.xlu0 0
      %609 = vperm.xlu0 %608, %v604
      %v610 = vpop.permute.xlu0 %609
      %613 = vset.pattern.permute.xlu0 0
      %614 = vperm.xlu0 %613, %v605
      %v615 = vpop.permute.xlu0 %614
      %618 = vset.pattern.permute.xlu0 0
      %619 = vperm.xlu0 %618, %v606
      %v620 = vpop.permute.xlu0 %619
      %622 = vmatprep.subr.mxu0 0.0
      %623 = vmatpush1.msra.mxu0 %v467
      %624 = vmatprep.subr.mxu0 0.0
      %625 = vmatpush1.msra.mxu0 %v466
      %626 = vmatprep.subr.mxu0 0.0
      %627 = vmatpush1.msra.mxu0 %v465
      %628 = vmatprep.subr.mxu0 0.0
      %629 = vmatpush1.msra.mxu0 %v464
      %630 = vmatprep.subr.mxu0 0.0
      %631 = vmatpush1.msra.mxu0 %v463
      %632 = vmatprep.subr.mxu0 0.0
      %633 = vmatpush1.msra.mxu0 %v462
      %634 = vmatprep.subr.mxu0 0.0
      %635 = vmatpush1.msra.mxu0 %v461
      %636 = vmatprep.subr.mxu0 0.0
      %637 = vmatpush1.msra.mxu0 %v460
      %638 = vmatprep.subr.mxu0 0.0
      %639 = vmatpush1.msra.mxu0 %v459
      %640 = vmatprep.subr.mxu0 0.0
      %641 = vmatpush1.msra.mxu0 %v458
      %642 = vmatprep.subr.mxu0 0.0
      %643 = vmatpush1.msra.mxu0 %v457
      %644 = vmatprep.subr.mxu0 0.0
      %645 = vmatpush1.msra.mxu0 %v456
      %646 = vmatprep.subr.mxu0 0.0
      %647 = vmatpush1.msra.mxu0 %v455
      %648 = vmatprep.subr.mxu0 0.0
      %649 = vmatpush1.msra.mxu0 %v454
      %650 = vmatprep.subr.mxu0 0.0
      %651 = vmatpush1.msra.mxu0 %v453
      %652 = vmatprep.subr.mxu0 0.0
      %653 = vmatpush1.msra.mxu0 %v452
      %654 = vmatprep.subr.mxu0 0.0
      %655 = vmatpush2.msra.mxu0 %v483
      %656 = vmatprep.subr.mxu0 0.0
      %657 = vmatpush2.msra.mxu0 %v482
      %658 = vmatprep.subr.mxu0 0.0
      %659 = vmatpush2.msra.mxu0 %v481
      %660 = vmatprep.subr.mxu0 0.0
      %661 = vmatpush2.msra.mxu0 %v480
      %662 = vmatprep.subr.mxu0 0.0
      %663 = vmatpush2.msra.mxu0 %v479
      %664 = vmatprep.subr.mxu0 0.0
      %665 = vmatpush2.msra.mxu0 %v478
      %666 = vmatprep.subr.mxu0 0.0
      %667 = vmatpush2.msra.mxu0 %v477
      %668 = vmatprep.subr.mxu0 0.0
      %669 = vmatpush2.msra.mxu0 %v476
      %670 = vmatprep.subr.mxu0 0.0
      %671 = vmatpush2.msra.mxu0 %v475
      %672 = vmatprep.subr.mxu0 0.0
      %673 = vmatpush2.msra.mxu0 %v474
      %674 = vmatprep.subr.mxu0 0.0
      %675 = vmatpush2.msra.mxu0 %v473
      %676 = vmatprep.subr.mxu0 0.0
      %677 = vmatpush2.msra.mxu0 %v472
      %678 = vmatprep.subr.mxu0 0.0
      %679 = vmatpush2.msra.mxu0 %v471
      %680 = vmatprep.subr.mxu0 0.0
      %681 = vmatpush2.msra.mxu0 %v470
      %682 = vmatprep.subr.mxu0 0.0
      %683 = vmatpush2.msra.mxu0 %v469
      %684 = vmatprep.subr.mxu0 0.0
      %685 = vmatpush2.msra.mxu0 %v468
      %686 = vmatprep.mubr.f32.mxu0 %v581
      %687 = vmatmul.mubr.f32.gmra.mxu0 %v580
      %v688 = vpop.f32.mrf.mxu0
      %v689 = vadd.f32 %v610, %v688
      %v690 = vpop.f32.mrf.mxu0
      %691 = vmatprep.mubr.f32.mxu0 %v589
      %692 = vmatmul.mubr.f32.gmra.mxu0 %v588
      %v693 = vpop.f32.mrf.mxu0
      %v694 = vadd.f32 %v615, %v693
      %v695 = vpop.f32.mrf.mxu0
      %696 = vmatprep.mubr.f32.mxu0 %v597
      %697 = vmatmul.mubr.f32.gmra.mxu0 %v596
      %v698 = vpop.f32.mrf.mxu0
      %v699 = vadd.f32 %v620, %v698
      %v700 = vpop.f32.mrf.mxu0
      %701 = vdwg.mxu0
      %702 = vmatprep.subr.mxu0 0.0
      %703 = vmatpush1.msra.mxu0 %v499
      %704 = vmatprep.subr.mxu0 0.0
      %705 = vmatpush1.msra.mxu0 %v498
      %706 = vmatprep.subr.mxu0 0.0
      %707 = vmatpush1.msra.mxu0 %v497
      %708 = vmatprep.subr.mxu0 0.0
      %709 = vmatpush1.msra.mxu0 %v496
      %710 = vmatprep.subr.mxu0 0.0
      %711 = vmatpush1.msra.mxu0 %v495
      %712 = vmatprep.subr.mxu0 0.0
      %713 = vmatpush1.msra.mxu0 %v494
      %714 = vmatprep.subr.mxu0 0.0
      %715 = vmatpush1.msra.mxu0 %v493
      %716 = vmatprep.subr.mxu0 0.0
      %717 = vmatpush1.msra.mxu0 %v492
      %718 = vmatprep.subr.mxu0 0.0
      %719 = vmatpush1.msra.mxu0 %v491
      %720 = vmatprep.subr.mxu0 0.0
      %721 = vmatpush1.msra.mxu0 %v490
      %722 = vmatprep.subr.mxu0 0.0
      %723 = vmatpush1.msra.mxu0 %v489
      %724 = vmatprep.subr.mxu0 0.0
      %725 = vmatpush1.msra.mxu0 %v488
      %726 = vmatprep.subr.mxu0 0.0
      %727 = vmatpush1.msra.mxu0 %v487
      %728 = vmatprep.subr.mxu0 0.0
      %729 = vmatpush1.msra.mxu0 %v486
      %730 = vmatprep.subr.mxu0 0.0
      %731 = vmatpush1.msra.mxu0 %v485
      %732 = vmatprep.subr.mxu0 0.0
      %733 = vmatpush1.msra.mxu0 %v484
      %734 = vmatprep.subr.mxu0 0.0
      %735 = vmatpush2.msra.mxu0 %v515
      %736 = vmatprep.subr.mxu0 0.0
      %737 = vmatpush2.msra.mxu0 %v514
      %738 = vmatprep.subr.mxu0 0.0
      %739 = vmatpush2.msra.mxu0 %v513
      %740 = vmatprep.subr.mxu0 0.0
      %741 = vmatpush2.msra.mxu0 %v512
      %742 = vmatprep.subr.mxu0 0.0
      %743 = vmatpush2.msra.mxu0 %v511
      %744 = vmatprep.subr.mxu0 0.0
      %745 = vmatpush2.msra.mxu0 %v510
      %746 = vmatprep.subr.mxu0 0.0
      %747 = vmatpush2.msra.mxu0 %v509
      %748 = vmatprep.subr.mxu0 0.0
      %749 = vmatpush2.msra.mxu0 %v508
      %750 = vmatprep.subr.mxu0 0.0
      %751 = vmatpush2.msra.mxu0 %v507
      %752 = vmatprep.subr.mxu0 0.0
      %753 = vmatpush2.msra.mxu0 %v506
      %754 = vmatprep.subr.mxu0 0.0
      %755 = vmatpush2.msra.mxu0 %v505
      %756 = vmatprep.subr.mxu0 0.0
      %757 = vmatpush2.msra.mxu0 %v504
      %758 = vmatprep.subr.mxu0 0.0
      %759 = vmatpush2.msra.mxu0 %v503
      %760 = vmatprep.subr.mxu0 0.0
      %761 = vmatpush2.msra.mxu0 %v502
      %762 = vmatprep.subr.mxu0 0.0
      %763 = vmatpush2.msra.mxu0 %v501
      %764 = vmatprep.subr.mxu0 0.0
      %765 = vmatpush2.msra.mxu0 %v500
      %766 = vmatprep.mubr.f32.mxu0 %v583
      %767 = vmatmul.mubr.f32.gmra.mxu0 %v582
      %v768 = vpop.f32.mrf.mxu0
      %v769 = vadd.f32 %v689, %v768
      %v770 = vpop.f32.mrf.mxu0
      %771 = vmatprep.mubr.f32.mxu0 %v591
      %772 = vmatmul.mubr.f32.gmra.mxu0 %v590
      %v773 = vpop.f32.mrf.mxu0
      %v774 = vadd.f32 %v694, %v773
      %v775 = vpop.f32.mrf.mxu0
      %776 = vmatprep.mubr.f32.mxu0 %v599
      %777 = vmatmul.mubr.f32.gmra.mxu0 %v598
      %v778 = vpop.f32.mrf.mxu0
      %v779 = vadd.f32 %v699, %v778
      %v780 = vpop.f32.mrf.mxu0
      %781 = vdwg.mxu0
      %782 = vmatprep.subr.mxu0 0.0
      %783 = vmatpush1.msra.mxu0 %v531
      %784 = vmatprep.subr.mxu0 0.0
      %785 = vmatpush1.msra.mxu0 %v530
      %786 = vmatprep.subr.mxu0 0.0
      %787 = vmatpush1.msra.mxu0 %v529
      %788 = vmatprep.subr.mxu0 0.0
      %789 = vmatpush1.msra.mxu0 %v528
      %790 = vmatprep.subr.mxu0 0.0
      %791 = vmatpush1.msra.mxu0 %v527
      %792 = vmatprep.subr.mxu0 0.0
      %793 = vmatpush1.msra.mxu0 %v526
      %794 = vmatprep.subr.mxu0 0.0
      %795 = vmatpush1.msra.mxu0 %v525
      %796 = vmatprep.subr.mxu0 0.0
      %797 = vmatpush1.msra.mxu0 %v524
      %798 = vmatprep.subr.mxu0 0.0
      %799 = vmatpush1.msra.mxu0 %v523
      %800 = vmatprep.subr.mxu0 0.0
      %801 = vmatpush1.msra.mxu0 %v522
      %802 = vmatprep.subr.mxu0 0.0
      %803 = vmatpush1.msra.mxu0 %v521
      %804 = vmatprep.subr.mxu0 0.0
      %805 = vmatpush1.msra.mxu0 %v520
      %806 = vmatprep.subr.mxu0 0.0
      %807 = vmatpush1.msra.mxu0 %v519
      %808 = vmatprep.subr.mxu0 0.0
      %809 = vmatpush1.msra.mxu0 %v518
      %810 = vmatprep.subr.mxu0 0.0
      %811 = vmatpush1.msra.mxu0 %v517
      %812 = vmatprep.subr.mxu0 0.0
      %813 = vmatpush1.msra.mxu0 %v516
      %814 = vmatprep.subr.mxu0 0.0
      %815 = vmatpush2.msra.mxu0 %v547
      %816 = vmatprep.subr.mxu0 0.0
      %817 = vmatpush2.msra.mxu0 %v546
      %818 = vmatprep.subr.mxu0 0.0
      %819 = vmatpush2.msra.mxu0 %v545
      %820 = vmatprep.subr.mxu0 0.0
      %821 = vmatpush2.msra.mxu0 %v544
      %822 = vmatprep.subr.mxu0 0.0
      %823 = vmatpush2.msra.mxu0 %v543
      %824 = vmatprep.subr.mxu0 0.0
      %825 = vmatpush2.msra.mxu0 %v542
      %826 = vmatprep.subr.mxu0 0.0
      %827 = vmatpush2.msra.mxu0 %v541
      %828 = vmatprep.subr.mxu0 0.0
      %829 = vmatpush2.msra.mxu0 %v540
      %830 = vmatprep.subr.mxu0 0.0
      %831 = vmatpush2.msra.mxu0 %v539
      %832 = vmatprep.subr.mxu0 0.0
      %833 = vmatpush2.msra.mxu0 %v538
      %834 = vmatprep.subr.mxu0 0.0
      %835 = vmatpush2.msra.mxu0 %v537
      %836 = vmatprep.subr.mxu0 0.0
      %837 = vmatpush2.msra.mxu0 %v536
      %838 = vmatprep.subr.mxu0 0.0
      %839 = vmatpush2.msra.mxu0 %v535
      %840 = vmatprep.subr.mxu0 0.0
      %841 = vmatpush2.msra.mxu0 %v534
      %842 = vmatprep.subr.mxu0 0.0
      %843 = vmatpush2.msra.mxu0 %v533
      %844 = vmatprep.subr.mxu0 0.0
      %845 = vmatpush2.msra.mxu0 %v532
      %846 = vmatprep.mubr.f32.mxu0 %v585
      %847 = vmatmul.mubr.f32.gmra.mxu0 %v584
      %v848 = vpop.f32.mrf.mxu0
      %v849 = vadd.f32 %v769, %v848
      %v850 = vpop.f32.mrf.mxu0
      %851 = vmatprep.mubr.f32.mxu0 %v593
      %852 = vmatmul.mubr.f32.gmra.mxu0 %v592
      %v853 = vpop.f32.mrf.mxu0
      %v854 = vadd.f32 %v774, %v853
      %v855 = vpop.f32.mrf.mxu0
      %856 = vmatprep.mubr.f32.mxu0 %v601
      %857 = vmatmul.mubr.f32.gmra.mxu0 %v600
      %v858 = vpop.f32.mrf.mxu0
      %v859 = vadd.f32 %v779, %v858
      %v860 = vpop.f32.mrf.mxu0
      %861 = vdwg.mxu0
      %862 = vmatprep.subr.mxu0 0.0
      %863 = vmatpush1.msra.mxu0 %v563
      %864 = vmatprep.subr.mxu0 0.0
      %865 = vmatpush1.msra.mxu0 %v562
      %866 = vmatprep.subr.mxu0 0.0
      %867 = vmatpush1.msra.mxu0 %v561
      %868 = vmatprep.subr.mxu0 0.0
      %869 = vmatpush1.msra.mxu0 %v560
      %870 = vmatprep.subr.mxu0 0.0
      %871 = vmatpush1.msra.mxu0 %v559
      %872 = vmatprep.subr.mxu0 0.0
      %873 = vmatpush1.msra.mxu0 %v558
      %874 = vmatprep.subr.mxu0 0.0
      %875 = vmatpush1.msra.mxu0 %v557
      %876 = vmatprep.subr.mxu0 0.0
      %877 = vmatpush1.msra.mxu0 %v556
      %878 = vmatprep.subr.mxu0 0.0
      %879 = vmatpush1.msra.mxu0 %v555
      %880 = vmatprep.subr.mxu0 0.0
      %881 = vmatpush1.msra.mxu0 %v554
      %882 = vmatprep.subr.mxu0 0.0
      %883 = vmatpush1.msra.mxu0 %v553
      %884 = vmatprep.subr.mxu0 0.0
      %885 = vmatpush1.msra.mxu0 %v552
      %886 = vmatprep.subr.mxu0 0.0
      %887 = vmatpush1.msra.mxu0 %v551
      %888 = vmatprep.subr.mxu0 0.0
      %889 = vmatpush1.msra.mxu0 %v550
      %890 = vmatprep.subr.mxu0 0.0
      %891 = vmatpush1.msra.mxu0 %v549
      %892 = vmatprep.subr.mxu0 0.0
      %893 = vmatpush1.msra.mxu0 %v548
      %894 = vmatprep.subr.mxu0 0.0
      %895 = vmatpush2.msra.mxu0 %v579
      %896 = vmatprep.subr.mxu0 0.0
      %897 = vmatpush2.msra.mxu0 %v578
      %898 = vmatprep.subr.mxu0 0.0
      %899 = vmatpush2.msra.mxu0 %v577
      %900 = vmatprep.subr.mxu0 0.0
      %901 = vmatpush2.msra.mxu0 %v576
      %902 = vmatprep.subr.mxu0 0.0
      %903 = vmatpush2.msra.mxu0 %v575
      %904 = vmatprep.subr.mxu0 0.0
      %905 = vmatpush2.msra.mxu0 %v574
      %906 = vmatprep.subr.mxu0 0.0
      %907 = vmatpush2.msra.mxu0 %v573
      %908 = vmatprep.subr.mxu0 0.0
      %909 = vmatpush2.msra.mxu0 %v572
      %910 = vmatprep.subr.mxu0 0.0
      %911 = vmatpush2.msra.mxu0 %v571
      %912 = vmatprep.subr.mxu0 0.0
      %913 = vmatpush2.msra.mxu0 %v570
      %914 = vmatprep.subr.mxu0 0.0
      %915 = vmatpush2.msra.mxu0 %v569
      %916 = vmatprep.subr.mxu0 0.0
      %917 = vmatpush2.msra.mxu0 %v568
      %918 = vmatprep.subr.mxu0 0.0
      %919 = vmatpush2.msra.mxu0 %v567
      %920 = vmatprep.subr.mxu0 0.0
      %921 = vmatpush2.msra.mxu0 %v566
      %922 = vmatprep.subr.mxu0 0.0
      %923 = vmatpush2.msra.mxu0 %v565
      %924 = vmatprep.subr.mxu0 0.0
      %925 = vmatpush2.msra.mxu0 %v564
      %926 = vmatprep.mubr.f32.mxu0 %v587
      %927 = vmatmul.mubr.f32.gmra.mxu0 %v586
      %v928 = vpop.f32.mrf.mxu0
      %v929 = vadd.f32 %v849, %v928
      %v930 = vpop.f32.mrf.mxu0
      %931 = vmatprep.mubr.f32.mxu0 %v595
      %932 = vmatmul.mubr.f32.gmra.mxu0 %v594
      %v933 = vpop.f32.mrf.mxu0
      %v934 = vadd.f32 %v854, %v933
      %v935 = vpop.f32.mrf.mxu0
      %936 = vmatprep.mubr.f32.mxu0 %v603
      %937 = vmatmul.mubr.f32.gmra.mxu0 %v602
      %v938 = vpop.f32.mrf.mxu0
      %v939 = vadd.f32 %v859, %v938
      %v940 = vpop.f32.mrf.mxu0
      %941 = vdwg.mxu0
      %v942 = vxor.u32 %v929, 2147483648
      %v943 = vxor.u32 %v934, 2147483648
      %v944 = vxor.u32 %v939, 2147483648
      %v945 = vmul.f32 %v942, 1.442695
      %v946 = vpow.pop %v945
      %v947 = vmul.f32 %v943, 1.442695
      %v948 = vpow.pop %v947
      %v949 = vmul.f32 %v944, 1.442695
      %v950 = vpow.pop %v949
      %v951 = vadd.f32 %v946, 1.0
      %v952 = vadd.f32 %v948, 1.0
      %v953 = vadd.f32 %v950, 1.0
      %v954 = vrcp.pop %v951
      %v955 = vmul.f32 1.0, %v954
      %v956 = vrcp.pop %v952
      %v957 = vmul.f32 1.0, %v956
      %v958 = vrcp.pop %v953
      %v959 = vmul.f32 1.0, %v958
      %v960 = vmul.f32 %v929, %v955
      %v961 = vmul.f32 %v934, %v957
      %v962 = vmul.f32 %v939, %v959
      %vm963 = vcmask 130048
      %964 = vst.msk [vmem:[%s441] sm:$0xff] %vm963, %v960
      %965 = vst.msk [vmem:[%s441 + $0x8] sm:$0xff] %vm963, %v961
      %966 = vst.msk [vmem:[%s441 + $0x10] sm:$0xff] %vm963, %v962
      %v967 = vld [vmem:[%s431] sm:$0xff]
      %v968 = vld [vmem:[%s431 + $0x8] sm:$0xff]
      %v969 = vld [vmem:[%s431 + $0x10] sm:$0xff]
      %v970 = vld [vmem:[%s431 + $0x18] sm:$0xff]
      %v971 = vld [vmem:[%s431 + $0x20] sm:$0xff]
      %v972 = vld [vmem:[%s431 + $0x28] sm:$0xff]
      %v973 = vld [vmem:[%s431 + $0x30] sm:$0xff]
      %v974 = vld [vmem:[%s431 + $0x38] sm:$0xff]
      %v975 = vld [vmem:[%s431 + $0x40] sm:$0xff]
      %v976 = vld [vmem:[%s431 + $0x48] sm:$0xff]
      %v977 = vld [vmem:[%s431 + $0x50] sm:$0xff]
      %v978 = vld [vmem:[%s431 + $0x58] sm:$0xff]
      %v979 = vld [vmem:[%s431 + $0x60] sm:$0xff]
      %v980 = vld [vmem:[%s431 + $0x68] sm:$0xff]
      %v981 = vld [vmem:[%s431 + $0x70] sm:$0xff]
      %v982 = vld [vmem:[%s431 + $0x78] sm:$0xff]
      %v983 = vld [vmem:[%s431 + $0x80] sm:$0xff]
      %v984 = vld [vmem:[%s431 + $0x88] sm:$0xff]
      %v985 = vld [vmem:[%s431 + $0x90] sm:$0xff]
      %v986 = vld [vmem:[%s431 + $0x98] sm:$0xff]
      %v987 = vld [vmem:[%s431 + $0xa0] sm:$0xff]
      %v988 = vld [vmem:[%s431 + $0xa8] sm:$0xff]
      %v989 = vld [vmem:[%s431 + $0xb0] sm:$0xff]
      %v990 = vld [vmem:[%s431 + $0xb8] sm:$0xff]
      %v991 = vld [vmem:[%s431 + $0xc0] sm:$0xff]
      %v992 = vld [vmem:[%s431 + $0xc8] sm:$0xff]
      %v993 = vld [vmem:[%s431 + $0xd0] sm:$0xff]
      %v994 = vld [vmem:[%s431 + $0xd8] sm:$0xff]
      %v995 = vld [vmem:[%s431 + $0xe0] sm:$0xff]
      %v996 = vld [vmem:[%s431 + $0xe8] sm:$0xff]
      %v997 = vld [vmem:[%s431 + $0xf0] sm:$0xff]
      %v998 = vld [vmem:[%s431 + $0xf8] sm:$0xff]
      %v999 = vld [vmem:[%s431 + $0x100] sm:$0xff]
      %v1000 = vld [vmem:[%s431 + $0x108] sm:$0xff]
      %v1001 = vld [vmem:[%s431 + $0x110] sm:$0xff]
      %v1002 = vld [vmem:[%s431 + $0x118] sm:$0xff]
      %v1003 = vld [vmem:[%s431 + $0x120] sm:$0xff]
      %v1004 = vld [vmem:[%s431 + $0x128] sm:$0xff]
      %v1005 = vld [vmem:[%s431 + $0x130] sm:$0xff]
      %v1006 = vld [vmem:[%s431 + $0x138] sm:$0xff]
      %v1007 = vld [vmem:[%s431 + $0x140] sm:$0xff]
      %v1008 = vld [vmem:[%s431 + $0x148] sm:$0xff]
      %v1009 = vld [vmem:[%s431 + $0x150] sm:$0xff]
      %v1010 = vld [vmem:[%s431 + $0x158] sm:$0xff]
      %v1011 = vld [vmem:[%s431 + $0x160] sm:$0xff]
      %v1012 = vld [vmem:[%s431 + $0x168] sm:$0xff]
      %v1013 = vld [vmem:[%s431 + $0x170] sm:$0xff]
      %v1014 = vld [vmem:[%s431 + $0x178] sm:$0xff]
      %v1015 = vld [vmem:[%s431 + $0x180] sm:$0xff]
      %v1016 = vld [vmem:[%s431 + $0x188] sm:$0xff]
      %v1017 = vld [vmem:[%s431 + $0x190] sm:$0xff]
      %v1018 = vld [vmem:[%s431 + $0x198] sm:$0xff]
      %v1019 = vld [vmem:[%s431 + $0x1a0] sm:$0xff]
      %v1020 = vld [vmem:[%s431 + $0x1a8] sm:$0xff]
      %v1021 = vld [vmem:[%s431 + $0x1b0] sm:$0xff]
      %v1022 = vld [vmem:[%s431 + $0x1b8] sm:$0xff]
      %v1023 = vld [vmem:[%s431 + $0x1c0] sm:$0xff]
      %v1024 = vld [vmem:[%s431 + $0x1c8] sm:$0xff]
      %v1025 = vld [vmem:[%s431 + $0x1d0] sm:$0xff]
      %v1026 = vld [vmem:[%s431 + $0x1d8] sm:$0xff]
      %v1027 = vld [vmem:[%s431 + $0x1e0] sm:$0xff]
      %v1028 = vld [vmem:[%s431 + $0x1e8] sm:$0xff]
      %v1029 = vld [vmem:[%s431 + $0x1f0] sm:$0xff]
      %v1030 = vld [vmem:[%s431 + $0x1f8] sm:$0xff]
      %v1031 = vld [vmem:[%s5] sm:$0xff]
      %v1032 = vld [vmem:[%s5 + $0x8] sm:$0xff]
      %v1033 = vld [vmem:[%s5 + $0x10] sm:$0xff]
      %v1034 = vld [vmem:[%s5 + $0x18] sm:$0xff]
      %v1035 = vld [vmem:[%s5 + $0x20] sm:$0xff]
      %v1036 = vld [vmem:[%s5 + $0x28] sm:$0xff]
      %v1037 = vld [vmem:[%s5 + $0x30] sm:$0xff]
      %v1038 = vld [vmem:[%s5 + $0x38] sm:$0xff]
      %v1039 = vld [vmem:[%s5 + $0x40] sm:$0xff]
      %v1040 = vld [vmem:[%s5 + $0x48] sm:$0xff]
      %v1041 = vld [vmem:[%s5 + $0x50] sm:$0xff]
      %v1042 = vld [vmem:[%s5 + $0x58] sm:$0xff]
      %v1043 = vld [vmem:[%s6] sm:$0xff]
      %v1044 = vld [vmem:[%s6 + $0x8] sm:$0xff]
      %v1045 = vld [vmem:[%s6 + $0x10] sm:$0xff]
      %1047 = vset.pattern.permute.xlu0 0
      %1048 = vperm.xlu0 %1047, %v1043
      %v1049 = vpop.permute.xlu0 %1048
      %1052 = vset.pattern.permute.xlu0 0
      %1053 = vperm.xlu0 %1052, %v1044
      %v1054 = vpop.permute.xlu0 %1053
      %1057 = vset.pattern.permute.xlu0 0
      %1058 = vperm.xlu0 %1057, %v1045
      %v1059 = vpop.permute.xlu0 %1058
      %1061 = vmatprep.subr.mxu0 0.0
      %1062 = vmatpush1.msra.mxu0 %v982
      %1063 = vmatprep.subr.mxu0 0.0
      %1064 = vmatpush1.msra.mxu0 %v981
      %1065 = vmatprep.subr.mxu0 0.0
      %1066 = vmatpush1.msra.mxu0 %v980
      %1067 = vmatprep.subr.mxu0 0.0
      %1068 = vmatpush1.msra.mxu0 %v979
      %1069 = vmatprep.subr.mxu0 0.0
      %1070 = vmatpush1.msra.mxu0 %v978
      %1071 = vmatprep.subr.mxu0 0.0
      %1072 = vmatpush1.msra.mxu0 %v977
      %1073 = vmatprep.subr.mxu0 0.0
      %1074 = vmatpush1.msra.mxu0 %v976
      %1075 = vmatprep.subr.mxu0 0.0
      %1076 = vmatpush1.msra.mxu0 %v975
      %1077 = vmatprep.subr.mxu0 0.0
      %1078 = vmatpush1.msra.mxu0 %v974
      %1079 = vmatprep.subr.mxu0 0.0
      %1080 = vmatpush1.msra.mxu0 %v973
      %1081 = vmatprep.subr.mxu0 0.0
      %1082 = vmatpush1.msra.mxu0 %v972
      %1083 = vmatprep.subr.mxu0 0.0
      %1084 = vmatpush1.msra.mxu0 %v971
      %1085 = vmatprep.subr.mxu0 0.0
      %1086 = vmatpush1.msra.mxu0 %v970
      %1087 = vmatprep.subr.mxu0 0.0
      %1088 = vmatpush1.msra.mxu0 %v969
      %1089 = vmatprep.subr.mxu0 0.0
      %1090 = vmatpush1.msra.mxu0 %v968
      %1091 = vmatprep.subr.mxu0 0.0
      %1092 = vmatpush1.msra.mxu0 %v967
      %1093 = vmatprep.subr.mxu0 0.0
      %1094 = vmatpush2.msra.mxu0 %v998
      %1095 = vmatprep.subr.mxu0 0.0
      %1096 = vmatpush2.msra.mxu0 %v997
      %1097 = vmatprep.subr.mxu0 0.0
      %1098 = vmatpush2.msra.mxu0 %v996
      %1099 = vmatprep.subr.mxu0 0.0
      %1100 = vmatpush2.msra.mxu0 %v995
      %1101 = vmatprep.subr.mxu0 0.0
      %1102 = vmatpush2.msra.mxu0 %v994
      %1103 = vmatprep.subr.mxu0 0.0
      %1104 = vmatpush2.msra.mxu0 %v993
      %1105 = vmatprep.subr.mxu0 0.0
      %1106 = vmatpush2.msra.mxu0 %v992
      %1107 = vmatprep.subr.mxu0 0.0
      %1108 = vmatpush2.msra.mxu0 %v991
      %1109 = vmatprep.subr.mxu0 0.0
      %1110 = vmatpush2.msra.mxu0 %v990
      %1111 = vmatprep.subr.mxu0 0.0
      %1112 = vmatpush2.msra.mxu0 %v989
      %1113 = vmatprep.subr.mxu0 0.0
      %1114 = vmatpush2.msra.mxu0 %v988
      %1115 = vmatprep.subr.mxu0 0.0
      %1116 = vmatpush2.msra.mxu0 %v987
      %1117 = vmatprep.subr.mxu0 0.0
      %1118 = vmatpush2.msra.mxu0 %v986
      %1119 = vmatprep.subr.mxu0 0.0
      %1120 = vmatpush2.msra.mxu0 %v985
      %1121 = vmatprep.subr.mxu0 0.0
      %1122 = vmatpush2.msra.mxu0 %v984
      %1123 = vmatprep.subr.mxu0 0.0
      %1124 = vmatpush2.msra.mxu0 %v983
      %1125 = vmatprep.mubr.f32.mxu0 %v1032
      %1126 = vmatmul.mubr.f32.gmra.mxu0 %v1031
      %v1127 = vpop.f32.mrf.mxu0
      %v1128 = vadd.f32 %v1049, %v1127
      %v1129 = vpop.f32.mrf.mxu0
      %1130 = vmatprep.mubr.f32.mxu0 %v1036
      %1131 = vmatmul.mubr.f32.gmra.mxu0 %v1035
      %v1132 = vpop.f32.mrf.mxu0
      %v1133 = vadd.f32 %v1054, %v1132
      %v1134 = vpop.f32.mrf.mxu0
      %1135 = vmatprep.mubr.f32.mxu0 %v1040
      %1136 = vmatmul.mubr.f32.gmra.mxu0 %v1039
      %v1137 = vpop.f32.mrf.mxu0
      %v1138 = vadd.f32 %v1059, %v1137
      %v1139 = vpop.f32.mrf.mxu0
      %1140 = vdwg.mxu0
      %1141 = vmatprep.subr.mxu0 0.0
      %1142 = vmatpush1.msra.mxu0 %v1014
      %1143 = vmatprep.subr.mxu0 0.0
      %1144 = vmatpush1.msra.mxu0 %v1013
      %1145 = vmatprep.subr.mxu0 0.0
      %1146 = vmatpush1.msra.mxu0 %v1012
      %1147 = vmatprep.subr.mxu0 0.0
      %1148 = vmatpush1.msra.mxu0 %v1011
      %1149 = vmatprep.subr.mxu0 0.0
      %1150 = vmatpush1.msra.mxu0 %v1010
      %1151 = vmatprep.subr.mxu0 0.0
      %1152 = vmatpush1.msra.mxu0 %v1009
      %1153 = vmatprep.subr.mxu0 0.0
      %1154 = vmatpush1.msra.mxu0 %v1008
      %1155 = vmatprep.subr.mxu0 0.0
      %1156 = vmatpush1.msra.mxu0 %v1007
      %1157 = vmatprep.subr.mxu0 0.0
      %1158 = vmatpush1.msra.mxu0 %v1006
      %1159 = vmatprep.subr.mxu0 0.0
      %1160 = vmatpush1.msra.mxu0 %v1005
      %1161 = vmatprep.subr.mxu0 0.0
      %1162 = vmatpush1.msra.mxu0 %v1004
      %1163 = vmatprep.subr.mxu0 0.0
      %1164 = vmatpush1.msra.mxu0 %v1003
      %1165 = vmatprep.subr.mxu0 0.0
      %1166 = vmatpush1.msra.mxu0 %v1002
      %1167 = vmatprep.subr.mxu0 0.0
      %1168 = vmatpush1.msra.mxu0 %v1001
      %1169 = vmatprep.subr.mxu0 0.0
      %1170 = vmatpush1.msra.mxu0 %v1000
      %1171 = vmatprep.subr.mxu0 0.0
      %1172 = vmatpush1.msra.mxu0 %v999
      %1173 = vmatprep.subr.mxu0 0.0
      %1174 = vmatpush2.msra.mxu0 %v1030
      %1175 = vmatprep.subr.mxu0 0.0
      %1176 = vmatpush2.msra.mxu0 %v1029
      %1177 = vmatprep.subr.mxu0 0.0
      %1178 = vmatpush2.msra.mxu0 %v1028
      %1179 = vmatprep.subr.mxu0 0.0
      %1180 = vmatpush2.msra.mxu0 %v1027
      %1181 = vmatprep.subr.mxu0 0.0
      %1182 = vmatpush2.msra.mxu0 %v1026
      %1183 = vmatprep.subr.mxu0 0.0
      %1184 = vmatpush2.msra.mxu0 %v1025
      %1185 = vmatprep.subr.mxu0 0.0
      %1186 = vmatpush2.msra.mxu0 %v1024
      %1187 = vmatprep.subr.mxu0 0.0
      %1188 = vmatpush2.msra.mxu0 %v1023
      %1189 = vmatprep.subr.mxu0 0.0
      %1190 = vmatpush2.msra.mxu0 %v1022
      %1191 = vmatprep.subr.mxu0 0.0
      %1192 = vmatpush2.msra.mxu0 %v1021
      %1193 = vmatprep.subr.mxu0 0.0
      %1194 = vmatpush2.msra.mxu0 %v1020
      %1195 = vmatprep.subr.mxu0 0.0
      %1196 = vmatpush2.msra.mxu0 %v1019
      %1197 = vmatprep.subr.mxu0 0.0
      %1198 = vmatpush2.msra.mxu0 %v1018
      %1199 = vmatprep.subr.mxu0 0.0
      %1200 = vmatpush2.msra.mxu0 %v1017
      %1201 = vmatprep.subr.mxu0 0.0
      %1202 = vmatpush2.msra.mxu0 %v1016
      %1203 = vmatprep.subr.mxu0 0.0
      %1204 = vmatpush2.msra.mxu0 %v1015
      %1205 = vmatprep.mubr.f32.mxu0 %v1034
      %1206 = vmatmul.mubr.f32.gmra.mxu0 %v1033
      %v1207 = vpop.f32.mrf.mxu0
      %v1208 = vadd.f32 %v1128, %v1207
      %v1209 = vpop.f32.mrf.mxu0
      %1210 = vmatprep.mubr.f32.mxu0 %v1038
      %1211 = vmatmul.mubr.f32.gmra.mxu0 %v1037
      %v1212 = vpop.f32.mrf.mxu0
      %v1213 = vadd.f32 %v1133, %v1212
      %v1214 = vpop.f32.mrf.mxu0
      %1215 = vmatprep.mubr.f32.mxu0 %v1042
      %1216 = vmatmul.mubr.f32.gmra.mxu0 %v1041
      %v1217 = vpop.f32.mrf.mxu0
      %v1218 = vadd.f32 %v1138, %v1217
      %v1219 = vpop.f32.mrf.mxu0
      %1220 = vdwg.mxu0
      %v1221 = vxor.u32 %v1208, 2147483648
      %v1222 = vxor.u32 %v1213, 2147483648
      %v1223 = vxor.u32 %v1218, 2147483648
      %v1224 = vmul.f32 %v1221, 1.442695
      %v1225 = vpow.pop %v1224
      %v1226 = vmul.f32 %v1222, 1.442695
      %v1227 = vpow.pop %v1226
      %v1228 = vmul.f32 %v1223, 1.442695
      %v1229 = vpow.pop %v1228
      %v1230 = vadd.f32 %v1225, 1.0
      %v1231 = vadd.f32 %v1227, 1.0
      %v1232 = vadd.f32 %v1229, 1.0
      %v1233 = vrcp.pop %v1230
      %v1234 = vmul.f32 1.0, %v1233
      %v1235 = vrcp.pop %v1231
      %v1236 = vmul.f32 1.0, %v1235
      %v1237 = vrcp.pop %v1232
      %v1238 = vmul.f32 1.0, %v1237
      %v1239 = vmul.f32 %v1208, %v1234
      %v1240 = vmul.f32 %v1213, %v1236
      %v1241 = vmul.f32 %v1218, %v1238
      %vm1242 = vcmask 523264
      %1243 = vst.msk [vmem:[%s446] sm:$0xff] %vm1242, %v1239
      %1244 = vst.msk [vmem:[%s446 + $0x8] sm:$0xff] %vm1242, %v1240
      %1245 = vst.msk [vmem:[%s446 + $0x10] sm:$0xff] %vm1242, %v1241
      %v1246 = vld [vmem:[%s436] sm:$0xff]
      %v1247 = vld [vmem:[%s436 + $0x8] sm:$0xff]
      %v1248 = vld [vmem:[%s436 + $0x10] sm:$0xff]
      %v1249 = vld [vmem:[%s436 + $0x18] sm:$0xff]
      %v1250 = vld [vmem:[%s436 + $0x20] sm:$0xff]
      %v1251 = vld [vmem:[%s436 + $0x28] sm:$0xff]
      %v1252 = vld [vmem:[%s436 + $0x30] sm:$0xff]
      %v1253 = vld [vmem:[%s436 + $0x38] sm:$0xff]
      %v1254 = vld [vmem:[%s436 + $0x40] sm:$0xff]
      %v1255 = vld [vmem:[%s436 + $0x48] sm:$0xff]
      %v1256 = vld [vmem:[%s436 + $0x50] sm:$0xff]
      %v1257 = vld [vmem:[%s436 + $0x58] sm:$0xff]
      %v1258 = vld [vmem:[%s436 + $0x60] sm:$0xff]
      %v1259 = vld [vmem:[%s436 + $0x68] sm:$0xff]
      %v1260 = vld [vmem:[%s436 + $0x70] sm:$0xff]
      %v1261 = vld [vmem:[%s436 + $0x78] sm:$0xff]
      %v1262 = vld [vmem:[%s436 + $0x80] sm:$0xff]
      %v1263 = vld [vmem:[%s436 + $0x88] sm:$0xff]
      %v1264 = vld [vmem:[%s436 + $0x90] sm:$0xff]
      %v1265 = vld [vmem:[%s436 + $0x98] sm:$0xff]
      %v1266 = vld [vmem:[%s436 + $0xa0] sm:$0xff]
      %v1267 = vld [vmem:[%s436 + $0xa8] sm:$0xff]
      %v1268 = vld [vmem:[%s436 + $0xb0] sm:$0xff]
      %v1269 = vld [vmem:[%s436 + $0xb8] sm:$0xff]
      %v1270 = vld [vmem:[%s436 + $0xc0] sm:$0xff]
      %v1271 = vld [vmem:[%s436 + $0xc8] sm:$0xff]
      %v1272 = vld [vmem:[%s436 + $0xd0] sm:$0xff]
      %v1273 = vld [vmem:[%s436 + $0xd8] sm:$0xff]
      %v1274 = vld [vmem:[%s436 + $0xe0] sm:$0xff]
      %v1275 = vld [vmem:[%s436 + $0xe8] sm:$0xff]
      %v1276 = vld [vmem:[%s436 + $0xf0] sm:$0xff]
      %v1277 = vld [vmem:[%s436 + $0xf8] sm:$0xff]
      %v1278 = vld [vmem:[%s436 + $0x100] sm:$0xff]
      %v1279 = vld [vmem:[%s436 + $0x108] sm:$0xff]
      %v1280 = vld [vmem:[%s436 + $0x110] sm:$0xff]
      %v1281 = vld [vmem:[%s436 + $0x118] sm:$0xff]
      %v1282 = vld [vmem:[%s436 + $0x120] sm:$0xff]
      %v1283 = vld [vmem:[%s436 + $0x128] sm:$0xff]
      %v1284 = vld [vmem:[%s436 + $0x130] sm:$0xff]
      %v1285 = vld [vmem:[%s436 + $0x138] sm:$0xff]
      %v1286 = vld [vmem:[%s436 + $0x140] sm:$0xff]
      %v1287 = vld [vmem:[%s436 + $0x148] sm:$0xff]
      %v1288 = vld [vmem:[%s436 + $0x150] sm:$0xff]
      %v1289 = vld [vmem:[%s436 + $0x158] sm:$0xff]
      %v1290 = vld [vmem:[%s436 + $0x160] sm:$0xff]
      %v1291 = vld [vmem:[%s436 + $0x168] sm:$0xff]
      %v1292 = vld [vmem:[%s436 + $0x170] sm:$0xff]
      %v1293 = vld [vmem:[%s436 + $0x178] sm:$0xff]
      %v1294 = vld [vmem:[%s436 + $0x180] sm:$0xff]
      %v1295 = vld [vmem:[%s436 + $0x188] sm:$0xff]
      %v1296 = vld [vmem:[%s436 + $0x190] sm:$0xff]
      %v1297 = vld [vmem:[%s436 + $0x198] sm:$0xff]
      %v1298 = vld [vmem:[%s436 + $0x1a0] sm:$0xff]
      %v1299 = vld [vmem:[%s436 + $0x1a8] sm:$0xff]
      %v1300 = vld [vmem:[%s436 + $0x1b0] sm:$0xff]
      %v1301 = vld [vmem:[%s436 + $0x1b8] sm:$0xff]
      %v1302 = vld [vmem:[%s436 + $0x1c0] sm:$0xff]
      %v1303 = vld [vmem:[%s436 + $0x1c8] sm:$0xff]
      %v1304 = vld [vmem:[%s436 + $0x1d0] sm:$0xff]
      %v1305 = vld [vmem:[%s436 + $0x1d8] sm:$0xff]
      %v1306 = vld [vmem:[%s436 + $0x1e0] sm:$0xff]
      %v1307 = vld [vmem:[%s436 + $0x1e8] sm:$0xff]
      %v1308 = vld [vmem:[%s436 + $0x1f0] sm:$0xff]
      %v1309 = vld [vmem:[%s436 + $0x1f8] sm:$0xff]
      %v1310 = vld [vmem:[%s7] sm:$0xff]
      %v1311 = vld [vmem:[%s7 + $0x8] sm:$0xff]
      %v1312 = vld [vmem:[%s7 + $0x10] sm:$0xff]
      %v1313 = vld [vmem:[%s7 + $0x18] sm:$0xff]
      %v1314 = vld [vmem:[%s7 + $0x20] sm:$0xff]
      %v1315 = vld [vmem:[%s7 + $0x28] sm:$0xff]
      %v1316 = vld [vmem:[%s8] sm:$0xff]
      %v1317 = vld [vmem:[%s8 + $0x8] sm:$0xff]
      %v1318 = vld [vmem:[%s8 + $0x10] sm:$0xff]
      %1320 = vset.pattern.permute.xlu0 0
      %1321 = vperm.xlu0 %1320, %v1316
      %v1322 = vpop.permute.xlu0 %1321
      %1325 = vset.pattern.permute.xlu0 0
      %1326 = vperm.xlu0 %1325, %v1317
      %v1327 = vpop.permute.xlu0 %1326
      %1330 = vset.pattern.permute.xlu0 0
      %1331 = vperm.xlu0 %1330, %v1318
      %v1332 = vpop.permute.xlu0 %1331
      %1334 = vmatprep.subr.mxu0 %v1277
      %1335 = vmatpush1.msra.mxu0 %v1276
      %1336 = vmatprep.subr.mxu0 %v1275
      %1337 = vmatpush1.msra.mxu0 %v1274
      %1338 = vmatprep.subr.mxu0 %v1273
      %1339 = vmatpush1.msra.mxu0 %v1272
      %1340 = vmatprep.subr.mxu0 %v1271
      %1341 = vmatpush1.msra.mxu0 %v1270
      %1342 = vmatprep.subr.mxu0 %v1269
      %1343 = vmatpush1.msra.mxu0 %v1268
      %1344 = vmatprep.subr.mxu0 %v1267
      %1345 = vmatpush1.msra.mxu0 %v1266
      %1346 = vmatprep.subr.mxu0 %v1265
      %1347 = vmatpush1.msra.mxu0 %v1264
      %1348 = vmatprep.subr.mxu0 %v1263
      %1349 = vmatpush1.msra.mxu0 %v1262
      %1350 = vmatprep.subr.mxu0 %v1261
      %1351 = vmatpush1.msra.mxu0 %v1260
      %1352 = vmatprep.subr.mxu0 %v1259
      %1353 = vmatpush1.msra.mxu0 %v1258
      %1354 = vmatprep.subr.mxu0 %v1257
      %1355 = vmatpush1.msra.mxu0 %v1256
      %1356 = vmatprep.subr.mxu0 %v1255
      %1357 = vmatpush1.msra.mxu0 %v1254
      %1358 = vmatprep.subr.mxu0 %v1253
      %1359 = vmatpush1.msra.mxu0 %v1252
      %1360 = vmatprep.subr.mxu0 %v1251
      %1361 = vmatpush1.msra.mxu0 %v1250
      %1362 = vmatprep.subr.mxu0 %v1249
      %1363 = vmatpush1.msra.mxu0 %v1248
      %1364 = vmatprep.subr.mxu0 %v1247
      %1365 = vmatpush1.msra.mxu0 %v1246
      %1366 = vmatprep.subr.mxu0 %v1309
      %1367 = vmatpush2.msra.mxu0 %v1308
      %1368 = vmatprep.subr.mxu0 %v1307
      %1369 = vmatpush2.msra.mxu0 %v1306
      %1370 = vmatprep.subr.mxu0 %v1305
      %1371 = vmatpush2.msra.mxu0 %v1304
      %1372 = vmatprep.subr.mxu0 %v1303
      %1373 = vmatpush2.msra.mxu0 %v1302
      %1374 = vmatprep.subr.mxu0 %v1301
      %1375 = vmatpush2.msra.mxu0 %v1300
      %1376 = vmatprep.subr.mxu0 %v1299
      %1377 = vmatpush2.msra.mxu0 %v1298
      %1378 = vmatprep.subr.mxu0 %v1297
      %1379 = vmatpush2.msra.mxu0 %v1296
      %1380 = vmatprep.subr.mxu0 %v1295
      %1381 = vmatpush2.msra.mxu0 %v1294
      %1382 = vmatprep.subr.mxu0 %v1293
      %1383 = vmatpush2.msra.mxu0 %v1292
      %1384 = vmatprep.subr.mxu0 %v1291
      %1385 = vmatpush2.msra.mxu0 %v1290
      %1386 = vmatprep.subr.mxu0 %v1289
      %1387 = vmatpush2.msra.mxu0 %v1288
      %1388 = vmatprep.subr.mxu0 %v1287
      %1389 = vmatpush2.msra.mxu0 %v1286
      %1390 = vmatprep.subr.mxu0 %v1285
      %1391 = vmatpush2.msra.mxu0 %v1284
      %1392 = vmatprep.subr.mxu0 %v1283
      %1393 = vmatpush2.msra.mxu0 %v1282
      %1394 = vmatprep.subr.mxu0 %v1281
      %1395 = vmatpush2.msra.mxu0 %v1280
      %1396 = vmatprep.subr.mxu0 %v1279
      %1397 = vmatpush2.msra.mxu0 %v1278
      %1398 = vmatprep.mubr.f32.mxu0 %v1311
      %1399 = vmatmul.mubr.f32.gmra.mxu0 %v1310
      %v1400 = vpop.f32.mrf.mxu0
      %v1401 = vadd.f32 %v1322, %v1400
      %v1402 = vpop.f32.mrf.mxu0
      %v1403 = vadd.f32 %v1322, %v1402
      %1404 = vmatprep.mubr.f32.mxu0 %v1313
      %1405 = vmatmul.mubr.f32.gmra.mxu0 %v1312
      %v1406 = vpop.f32.mrf.mxu0
      %v1407 = vadd.f32 %v1327, %v1406
      %v1408 = vpop.f32.mrf.mxu0
      %v1409 = vadd.f32 %v1327, %v1408
      %1410 = vmatprep.mubr.f32.mxu0 %v1315
      %1411 = vmatmul.mubr.f32.gmra.mxu0 %v1314
      %v1412 = vpop.f32.mrf.mxu0
      %v1413 = vadd.f32 %v1332, %v1412
      %v1414 = vpop.f32.mrf.mxu0
      %v1415 = vadd.f32 %v1332, %v1414
      %1416 = vdwg.mxu0
      %v1417 = vxor.u32 %v1401, 2147483648
      %v1418 = vxor.u32 %v1403, 2147483648
      %v1419 = vxor.u32 %v1407, 2147483648
      %v1420 = vxor.u32 %v1409, 2147483648
      %v1421 = vxor.u32 %v1413, 2147483648
      %v1422 = vxor.u32 %v1415, 2147483648
      %v1423 = vmul.f32 %v1417, 1.442695
      %v1424 = vpow.pop %v1423
      %v1425 = vmul.f32 %v1418, 1.442695
      %v1426 = vpow.pop %v1425
      %v1427 = vmul.f32 %v1419, 1.442695
      %v1428 = vpow.pop %v1427
      %v1429 = vmul.f32 %v1420, 1.442695
      %v1430 = vpow.pop %v1429
      %v1431 = vmul.f32 %v1421, 1.442695
      %v1432 = vpow.pop %v1431
      %v1433 = vmul.f32 %v1422, 1.442695
      %v1434 = vpow.pop %v1433
      %v1435 = vadd.f32 %v1424, 1.0
      %v1436 = vadd.f32 %v1426, 1.0
      %v1437 = vadd.f32 %v1428, 1.0
      %v1438 = vadd.f32 %v1430, 1.0
      %v1439 = vadd.f32 %v1432, 1.0
      %v1440 = vadd.f32 %v1434, 1.0
      %v1441 = vrcp.pop %v1435
      %v1442 = vmul.f32 1.0, %v1441
      %v1443 = vrcp.pop %v1436
      %v1444 = vmul.f32 1.0, %v1443
      %v1445 = vrcp.pop %v1437
      %v1446 = vmul.f32 1.0, %v1445
      %v1447 = vrcp.pop %v1438
      %v1448 = vmul.f32 1.0, %v1447
      %v1449 = vrcp.pop %v1439
      %v1450 = vmul.f32 1.0, %v1449
      %v1451 = vrcp.pop %v1440
      %v1452 = vmul.f32 1.0, %v1451
      %v1453 = vmul.f32 %v1401, %v1442
      %v1454 = vmul.f32 %v1403, %v1444
      %v1455 = vmul.f32 %v1407, %v1446
      %v1456 = vmul.f32 %v1409, %v1448
      %v1457 = vmul.f32 %v1413, %v1450
      %v1458 = vmul.f32 %v1415, %v1452
      %1459 = vst [vmem:[%s451] sm:$0xff] %v1453
      %1460 = vst [vmem:[%s451 + $0x8] sm:$0xff] %v1454
      %1461 = vst [vmem:[%s451 + $0x10] sm:$0xff] %v1455
      %1462 = vst [vmem:[%s451 + $0x18] sm:$0xff] %v1456
      %1463 = vst [vmem:[%s451 + $0x20] sm:$0xff] %v1457
      %1464 = vst [vmem:[%s451 + $0x28] sm:$0xff] %v1458
      %p1465 = scmp.lt.s32.totalorder %s23, 1
      %s1466 = scalar_select %p1465, %s23, 1
      %s1467 = smul.addr %s1466, 3
      %s1468 = smul.addr %s1467, 8
      %s1469 = scalar_lea.vmem %s9, %s1468
      %p1470 = scmp.lt.s32.totalorder %s23, 1
      %s1471 = scalar_select %p1470, %s23, 1
      %s1472 = smul.addr %s1471, 3
      %s1473 = smul.addr %s1472, 8
      %s1474 = scalar_lea.vmem %s10, %s1473
      %p1475 = scmp.lt.s32.totalorder %s23, 1
      %s1476 = scalar_select %p1475, %s23, 1
      %s1477 = smul.addr %s1476, 6
      %s1478 = smul.addr %s1477, 8
      %s1479 = scalar_lea.vmem %s11, %s1478
      // Predicated region
      $region57: #{_lambda_.1} parent=55 // pred_check
        %p1480 = pneg %p245
      $region58: #{_lambda_.1} parent=55 // pred_check_branch
        %1482 = sbr.rel (%p1480) target = $region60
      $region59: #{_lambda_.1} parent=55 // pred_region
        _
      $region60: #{_lambda_.1} parent=55 // pred_fallthru
        _
      // Predicated region
      $region61: #{_lambda_.1} parent=55 // pred_check
        %p1483 = pneg %p271
      $region62: #{_lambda_.1} parent=55 // pred_check_branch
        %1485 = sbr.rel (%p1483) target = $region64
      $region63: #{_lambda_.1} parent=55 // pred_region
        _
      $region64: #{_lambda_.1} parent=55 // pred_fallthru
        _
      // Predicated region
      $region65: #{_lambda_.1} parent=55 // pred_check
        %p1486 = pneg %p297
      $region66: #{_lambda_.1} parent=55 // pred_check_branch
        %1488 = sbr.rel (%p1486) target = $region68
      $region67: #{_lambda_.1} parent=55 // pred_region
        _
      $region68: #{_lambda_.1} parent=55 // pred_fallthru
        _
    $region56: #{_lambda_.1} parent=5 // pred_fallthru
      _
    %p1489 = scmp.le.s32.totalorder 2, %s18
    // Predicated region
    $region69: #{_lambda_.1} parent=5 // pred_check
      %p1490 = pneg %p1489
    $region70: #{_lambda_.1} parent=5 // pred_check_branch
      %1492 = sbr.rel (%p1490) target = $region72
    $region71: #{_lambda_.1} parent=5 // pred_region
      %s1493 = ssub.s32 %s18, 2
      // Predicated region
      $region73: #{_lambda_.1} parent=71 // pred_check
        %p1494 = pneg %p251
      $region74: #{_lambda_.1} parent=71 // pred_check_branch
        %1496 = sbr.rel (%p1494) target = $region76
      $region75: #{_lambda_.1} parent=71 // pred_region
        %p1497 = scmp.lt.s32.totalorder %s24, 1
        %s1498 = scalar_select %p1497, %s24, 1
        %s1499 = smul.addr %s1498, 3
        %s1500 = smul.addr %s1499, 8
        %s1501 = scalar_lea.vmem %s9, %s1500
      $region76: #{_lambda_.1} parent=71 // pred_fallthru
        _
      // Predicated region
      $region77: #{_lambda_.1} parent=71 // pred_check
        %p1502 = pneg %p277
      $region78: #{_lambda_.1} parent=71 // pred_check_branch
        %1504 = sbr.rel (%p1502) target = $region80
      $region79: #{_lambda_.1} parent=71 // pred_region
        %p1505 = scmp.lt.s32.totalorder %s24, 1
        %s1506 = scalar_select %p1505, %s24, 1
        %s1507 = smul.addr %s1506, 3
        %s1508 = smul.addr %s1507, 8
        %s1509 = scalar_lea.vmem %s10, %s1508
      $region80: #{_lambda_.1} parent=71 // pred_fallthru
        _
      // Predicated region
      $region81: #{_lambda_.1} parent=71 // pred_check
        %p1510 = pneg %p303
      $region82: #{_lambda_.1} parent=71 // pred_check_branch
        %1512 = sbr.rel (%p1510) target = $region84
      $region83: #{_lambda_.1} parent=71 // pred_region
        %p1513 = scmp.lt.s32.totalorder %s24, 1
        %s1514 = scalar_select %p1513, %s24, 1
        %s1515 = smul.addr %s1514, 6
        %s1516 = smul.addr %s1515, 8
        %s1517 = scalar_lea.vmem %s11, %s1516
      $region84: #{_lambda_.1} parent=71 // pred_fallthru
        _
    $region72: #{_lambda_.1} parent=5 // pred_fallthru
      _
  $region6: #{_lambda_.1} parent=0 // loop_footer
    %s22 = sadd.s32 1, %s18
  $region7: #{_lambda_.1} parent=0 // loop_footer_branch
    %17 = sbr.rel target = $region3
  $region8: #{_lambda_.1} parent=0 // loop_exit
    _

</llo_original>
